<compile_context>
chip_gen: v7x
topology: tpu7x:2x2x1
jax: 0.10.0
libtpu: 0.0.40
codegen_flags: <defaults>
</compile_context>

<pallas_src>
import jax
import jax.numpy as jnp
import numpy as np
from jax import lax
from jax.experimental import pallas as pl
from jax.experimental.pallas import tpu as pltpu

JACCARD_THRESH = 0.5
NEG_POS_RATIO = 3
VARIANCES = (0.1, 0.2)


def _round_up(x, m):
    return ((x + m - 1) // m) * m


def _choose_tiling(d, max_td=4096):
    """Return (d_pad, td): D padded to a lane-aligned extent plus an anchor
    tile size that divides it (the full image whenever it fits)."""
    d128 = _round_up(d, 128)
    if d128 <= max_td:
        return d128, d128
    t = (max_td // 128) * 128
    while t >= 1024:
        if d128 % t == 0:
            return d128, t
        t -= 128
    # ragged D with no good divisor: pad further so a fixed 2048 tile divides.
    return _round_up(d, 2048), 2048


# --------------------------- fused Pallas kernel -----------------------------
def _make_kernel(td, n_t, true_d, neg_pos):
    d_pad = td * n_t
    padded = d_pad > true_d

    def kernel(loc_p_ref, loc_t_ref, conf_ref, lbl_ref, out_ref,
               ce_neg_scr, np_acc, ll_acc, cp_acc):
        t = pl.program_id(1)

        @pl.when(t == 0)
        def _init():
            np_acc[...] = jnp.zeros_like(np_acc)
            ll_acc[...] = jnp.zeros_like(ll_acc)
            cp_acc[...] = jnp.zeros_like(cp_acc)

        lbl = lbl_ref[0]                                    # (1, td) int32
        pos = lbl > 0
        posf = pos.astype(jnp.float32)                      # (1, td)

        # ---- cross entropy: relayout (td, C) -> (C, td) on the XLU so anchors
        #      stay lane-dense for everything downstream. ---------------------
        conf = jnp.transpose(conf_ref[0].astype(jnp.float32), (1, 0))  # (C, td)
        m = jnp.max(conf, axis=0, keepdims=True)                        # (1, td)
        z = conf - m
        lse = jnp.log(jnp.sum(jnp.exp(z), axis=0, keepdims=True))       # (1, td)
        cls = lax.broadcasted_iota(jnp.int32, conf.shape, 0)            # (C, td)
        z_tgt = jnp.sum(jnp.where(cls == lbl, z, 0.0), axis=0, keepdims=True)
        ce = lse - z_tgt                                                # (1, td)

        np_acc[...] += jnp.sum(posf, keepdims=True)
        cp_acc[...] += jnp.sum(posf * ce, keepdims=True)    # CE over positives

        ce_neg = jnp.where(pos, 0.0, ce)
        if padded:
            # padded anchors must never enter hard-negative mining
            gidx = t * td + lax.broadcasted_iota(jnp.int32, ce.shape, 1)
            ce_neg = jnp.where(gidx < true_d, ce_neg, 0.0)
        ce_neg_scr[pl.ds(t, 1), :] = ce_neg                 # stage tile t

        # ---- smooth L1 (beta=1) over positive anchors -----------------------
        dif = jnp.transpose(
            loc_p_ref[0].astype(jnp.float32) - loc_t_ref[0].astype(jnp.float32),
            (1, 0))                                                     # (4, td)
        ad = jnp.abs(dif)
        sl1 = jnp.sum(jnp.where(ad < 1.0, 0.5 * dif * dif, ad - 0.5),
                      axis=0, keepdims=True)                            # (1, td)
        ll_acc[...] += jnp.sum(posf * sl1, keepdims=True)

        # ---- hard negative mining + per-image writeback (last tile only) ----
        @pl.when(t == n_t - 1)
        def _finalize():
            num_pos = np_acc[...]                                       # (1, 1)
            k = jnp.minimum(num_pos * float(neg_pos), float(true_d))    # num_neg

            # Exact k-th largest value of ce_neg via binary search over its
            # float32 bit pattern (monotone for the non-negative ce_neg).
            def bs_body(_, carry):
                lo, hi = carry                                          # (1,1) i32
                mid = lo + ((hi - lo + 1) >> 1)
                thr = pltpu.bitcast(mid, jnp.float32)                   # (1, 1)
                cnt = jnp.sum((ce_neg_scr[...] >= thr).astype(jnp.float32),
                              keepdims=True)                            # (1, 1)
                take = cnt >= k
                return jnp.where(take, mid, lo), jnp.where(take, hi, mid - 1)

            lo0 = jnp.zeros((1, 1), dtype=jnp.int32)
            hi0 = jnp.full((1, 1), 0x7F800000, dtype=jnp.int32)         # +inf bits
            lo, _ = lax.fori_loop(0, 32, bs_body, (lo0, hi0))
            cutoff = pltpu.bitcast(lo, jnp.float32)                     # (1, 1)

            v = ce_neg_scr[...]                                         # (n_t, td)
            gt = v > cutoff
            sum_gt = jnp.sum(jnp.where(gt, v, 0.0), keepdims=True)      # (1, 1)
            cnt_gt = jnp.sum(gt.astype(jnp.float32), keepdims=True)     # (1, 1)
            rem = k - cnt_gt            # number of ties at the cutoff to take
            neg_sum = sum_gt + jnp.where(rem > 0.0, rem * cutoff, 0.0)
            loss_c = cp_acc[...] + neg_sum                              # (1, 1)

            lane = lax.broadcasted_iota(jnp.int32, (1, 128), 1)
            slab = (jnp.where(lane == 0, num_pos, 0.0)
                    + jnp.where(lane == 1, ll_acc[...], 0.0)
                    + jnp.where(lane == 2, loss_c, 0.0))                # (1, 128)
            out_ref[...] = slab[None]                                   # (1,1,128)

    return kernel


def ssd_fused_losses(loc_p, loc_t, conf, labels, *, true_d, neg_pos, td):
    """loc_p/loc_t: (B, D_pad, 4) f32; conf: (B, D_pad, C) f32;
    labels: (B, 1, D_pad) int32.  Returns a (B, 1, 128) stats slab with
    lane 0 = num_pos, lane 1 = smooth-L1 sum, lane 2 = HNM conf-loss sum."""
    B, d_pad, C = conf.shape
    assert d_pad % td == 0
    n_t = d_pad // td
    kernel = _make_kernel(td, n_t, true_d, neg_pos)

    return pl.pallas_call(
        kernel,
        out_shape=jax.ShapeDtypeStruct((B, 1, 128), jnp.float32),
        grid_spec=pltpu.PrefetchScalarGridSpec(
            num_scalar_prefetch=0,
            grid=(B, n_t),
            in_specs=[
                pl.BlockSpec((1, td, 4), lambda b, t: (b, t, 0)),
                pl.BlockSpec((1, td, 4), lambda b, t: (b, t, 0)),
                pl.BlockSpec((1, td, C), lambda b, t: (b, t, 0)),
                pl.BlockSpec((1, 1, td), lambda b, t: (b, 0, t)),
            ],
            out_specs=pl.BlockSpec((1, 1, 128), lambda b, t: (b, 0, 0)),
            scratch_shapes=[
                pltpu.VMEM((n_t, td), jnp.float32),   # ce_neg for the whole image
                pltpu.VMEM((1, 1), jnp.float32),      # num_pos accumulator
                pltpu.VMEM((1, 1), jnp.float32),      # smooth-L1 accumulator
                pltpu.VMEM((1, 1), jnp.float32),      # CE-over-positives accumulator
            ],
        ),
        compiler_params=pltpu.CompilerParams(
            dimension_semantics=("parallel", "arbitrary"),
            vmem_limit_bytes=48 * 1024 * 1024),
    )(loc_p, loc_t, conf, labels)


# ----------------------------- match() glue (plain JAX) ---------------------
def _point_form(boxes):
    return jnp.concatenate([boxes[:, :2] - boxes[:, 2:] / 2.0,
                            boxes[:, :2] + boxes[:, 2:] / 2.0], axis=1)


def _jaccard(box_a, box_b):
    max_xy = jnp.minimum(box_a[:, None, 2:], box_b[None, :, 2:])
    min_xy = jnp.maximum(box_a[:, None, :2], box_b[None, :, :2])
    wh = jnp.maximum(max_xy - min_xy, 0.0)
    inter = wh[..., 0] * wh[..., 1]
    area_a = ((box_a[:, 2] - box_a[:, 0]) * (box_a[:, 3] - box_a[:, 1]))[:, None]
    area_b = ((box_b[:, 2] - box_b[:, 0]) * (box_b[:, 3] - box_b[:, 1]))[None, :]
    return inter / (area_a + area_b - inter)


def _encode(matched, priors, variances):
    g_cxcy = (matched[:, :2] + matched[:, 2:]) / 2.0 - priors[:, :2]
    g_cxcy = g_cxcy / (variances[0] * priors[:, 2:])
    g_wh = (matched[:, 2:] - matched[:, :2]) / priors[:, 2:]
    g_wh = jnp.log(g_wh) / variances[1]
    return jnp.concatenate([g_cxcy, g_wh], axis=1)


def _match_one(truths, labels, dbox, threshold, variances):
    # TODO(synk): matching (IoU over tiny num_objs + data-dependent scatter)
    # kept in plain JAX glue; the hot path lives in the fused Pallas kernel.
    overlaps = _jaccard(truths, _point_form(dbox))          # (num_objs, D)
    best_prior_idx = jnp.argmax(overlaps, axis=1)           # (num_objs,)
    best_truth_overlap = jnp.max(overlaps, axis=0)          # (D,)
    best_truth_idx = jnp.argmax(overlaps, axis=0)           # (D,)
    best_truth_overlap = best_truth_overlap.at[best_prior_idx].set(2.0)
    best_truth_idx = best_truth_idx.at[best_prior_idx].set(
        jnp.arange(truths.shape[0], dtype=best_truth_idx.dtype))
    matches = truths[best_truth_idx]                        # (D, 4)
    conf = labels.astype(jnp.int32)[best_truth_idx] + 1
    conf = jnp.where(best_truth_overlap < threshold, 0, conf)
    loc = _encode(matches, dbox, variances)
    return loc.astype(jnp.float32), conf.astype(jnp.int32)


# ----------------------------- MultiBoxLoss forward --------------------------
def multibox_loss(predictions, targets, jaccard_thresh=JACCARD_THRESH,
                  neg_pos=NEG_POS_RATIO):
    loc_data, conf_data, dbox_list = predictions
    B, D, C = conf_data.shape

    loc_t, conf_t = jax.vmap(
        lambda t: _match_one(t[:, :4], t[:, 4], dbox_list, jaccard_thresh,
                             VARIANCES))(targets)            # (B,D,4), (B,D)

    d_pad, td = _choose_tiling(D)
    pad = d_pad - D
    loc_p = loc_data.astype(jnp.float32)
    loc_t = loc_t.astype(jnp.float32)
    conf_p = conf_data.astype(jnp.float32)
    lbl = conf_t.astype(jnp.int32)
    if pad:
        # TODO(synk): this pad is one extra pass over conf; a detection head
        # that emits D already rounded to a multiple of 128 avoids it entirely.
        loc_p = jnp.pad(loc_p, ((0, 0), (0, pad), (0, 0)))
        loc_t = jnp.pad(loc_t, ((0, 0), (0, pad), (0, 0)))
        conf_p = jnp.pad(conf_p, ((0, 0), (0, pad), (0, 0)))
        lbl = jnp.pad(lbl, ((0, 0), (0, pad)))
    lbl3 = lbl.reshape(B, 1, d_pad)

    stats = ssd_fused_losses(loc_p, loc_t, conf_p, lbl3,
                             true_d=D, neg_pos=neg_pos, td=td)   # (B, 1, 128)

    num_pos = stats[:, 0, 0]
    # NOTE: like the PyTorch original, N == 0 (no positives anywhere) yields
    # NaN/Inf; semantics preserved intentionally.
    n = jnp.sum(num_pos)
    loss_l = jnp.sum(stats[:, 0, 1]) / n
    loss_c = jnp.sum(stats[:, 0, 2]) / n
    return loss_l, loss_c


# ----------------------------- pure-JAX reference ----------------------------
def reference_loss(loc_data, conf_data, loc_t, conf_t, neg_pos=NEG_POS_RATIO):
    B, D, C = conf_data.shape
    pos = conf_t > 0
    diff = loc_data - loc_t
    ad = jnp.abs(diff)
    sl1 = jnp.sum(jnp.where(ad < 1.0, 0.5 * diff * diff, ad - 0.5), axis=-1)
    loss_l = jnp.sum(jnp.where(pos, sl1, 0.0))

    logp = jax.nn.log_softmax(conf_data, axis=-1)
    ce = -jnp.take_along_axis(logp, conf_t[..., None], axis=-1)[..., 0]
    ce_neg = jnp.where(pos, 0.0, ce)
    loss_idx = jnp.argsort(-ce_neg, axis=1)
    idx_rank = jnp.argsort(loss_idx, axis=1)
    num_pos = jnp.sum(pos, axis=1, keepdims=True)
    num_neg = jnp.minimum(num_pos * neg_pos, D)
    neg = idx_rank < num_neg
    sel = pos | neg
    loss_c = jnp.sum(jnp.where(sel, ce, 0.0))
    n = jnp.sum(num_pos)
    return loss_l / n, loss_c / n


if __name__ == "__main__":
    B, D, C, num_objs = 2, 1024, 21, 3
    key = jax.random.PRNGKey(0)
    k1, k2, k3, k4, k5, k6, k7 = jax.random.split(key, 7)

    # default boxes in (cx, cy, w, h)
    cxcy = jax.random.uniform(k1, (D, 2), minval=0.2, maxval=0.8)
    wh = jax.random.uniform(k2, (D, 2), minval=0.05, maxval=0.3)
    dbox_list = jnp.concatenate([cxcy, wh], axis=1).astype(jnp.float32)

    # ground-truth targets [B, num_objs, 5] = (xmin, ymin, xmax, ymax, label)
    tl = jax.random.uniform(k3, (B, num_objs, 2), minval=0.05, maxval=0.5)
    wh_gt = jax.random.uniform(k4, (B, num_objs, 2), minval=0.1, maxval=0.45)
    lbl_gt = jax.random.randint(k5, (B, num_objs, 1), 0, C - 1).astype(jnp.float32)
    targets = jnp.concatenate([tl, tl + wh_gt, lbl_gt], axis=-1)

    loc_data = 0.1 * jax.random.normal(k6, (B, D, 4), dtype=jnp.float32)
    conf_data = jax.random.normal(k7, (B, D, C), dtype=jnp.float32)

    loss_l, loss_c = multibox_loss((loc_data, conf_data, dbox_list), targets)
    loss_l, loss_c = jax.block_until_ready((loss_l, loss_c))

    # pure-JAX reference check of the kernel results
    loc_t, conf_t = jax.vmap(
        lambda t: _match_one(t[:, :4], t[:, 4], dbox_list, JACCARD_THRESH,
                             VARIANCES))(targets)
    ref_l, ref_c = reference_loss(loc_data, conf_data, loc_t, conf_t)
    np.testing.assert_allclose(np.asarray(loss_l), np.asarray(ref_l),
                               rtol=1e-3, atol=1e-4)
    np.testing.assert_allclose(np.asarray(loss_c), np.asarray(ref_c),
                               rtol=1e-3, atol=1e-4)

    print("KERNEL_OK")
</pallas_src>

<mosaic_0001>
module attributes {stable_mosaic.version = 11 : i64} {
  func.func @kernel(%arg0: i32, %arg1: i32, %arg2: memref<1x1024x4xf32, #tpu.memory_space<vmem>>, %arg3: memref<1x1024x4xf32, #tpu.memory_space<vmem>>, %arg4: memref<1x1024x21xf32, #tpu.memory_space<vmem>>, %arg5: memref<1x1x1024xi32, #tpu.memory_space<vmem>>, %arg6: memref<1x1x128xf32, #tpu.memory_space<vmem>>, %arg7: memref<1x1024xf32, #tpu.memory_space<vmem>>, %arg8: memref<1x1xf32, #tpu.memory_space<vmem>>, %arg9: memref<1x1xf32, #tpu.memory_space<vmem>>, %arg10: memref<1x1xf32, #tpu.memory_space<vmem>>) attributes {dimension_semantics = [#tpu.dimension_semantics<parallel>, #tpu.dimension_semantics<arbitrary>], iteration_bounds = array<i64: 2, 1>, scalar_prefetch = 0 : i64, scratch_operands = 4 : i64, tpu.core_type = #tpu.core_type<tc>, window_params = [{transform_indices = @transform_0, window_bounds = array<i64: 1, 1024, 4>}, {transform_indices = @transform_1, window_bounds = array<i64: 1, 1024, 4>}, {transform_indices = @transform_2, window_bounds = array<i64: 1, 1024, 21>}, {transform_indices = @transform_3, window_bounds = array<i64: 1, 1, 1024>}, {transform_indices = @transform_4, window_bounds = array<i64: 1, 1, 128>}]} {
    %c0_i32 = arith.constant 0 : i32
    %0 = arith.cmpi eq, %arg1, %c0_i32 : i32
    %1 = arith.extui %0 : i1 to i32
    %c0_i32_0 = arith.constant 0 : i32
    %2 = arith.cmpi ne, %1, %c0_i32_0 : i32
    scf.if %2 {
      %cst_39 = arith.constant 0.000000e+00 : f32
      %78 = vector.broadcast %cst_39 : f32 to vector<1x1xf32>
      %c0_40 = arith.constant 0 : index
      %c0_41 = arith.constant 0 : index
      %79 = vector.load %arg8[%c0_40, %c0_41] : memref<1x1xf32, #tpu.memory_space<vmem>>, vector<1x1xf32>
      tpu.vector_store %arg8[%c0_40, %c0_41], %78 {strides = array<i32>} : memref<1x1xf32, #tpu.memory_space<vmem>>, vector<1x1xf32>,
      %cst_42 = arith.constant 0.000000e+00 : f32
      %80 = vector.broadcast %cst_42 : f32 to vector<1x1xf32>
      %c0_43 = arith.constant 0 : index
      %c0_44 = arith.constant 0 : index
      %81 = vector.load %arg9[%c0_43, %c0_44] : memref<1x1xf32, #tpu.memory_space<vmem>>, vector<1x1xf32>
      tpu.vector_store %arg9[%c0_43, %c0_44], %80 {strides = array<i32>} : memref<1x1xf32, #tpu.memory_space<vmem>>, vector<1x1xf32>,
      %cst_45 = arith.constant 0.000000e+00 : f32
      %82 = vector.broadcast %cst_45 : f32 to vector<1x1xf32>
      %c0_46 = arith.constant 0 : index
      %c0_47 = arith.constant 0 : index
      %83 = vector.load %arg10[%c0_46, %c0_47] : memref<1x1xf32, #tpu.memory_space<vmem>>, vector<1x1xf32>
      tpu.vector_store %arg10[%c0_46, %c0_47], %82 {strides = array<i32>} : memref<1x1xf32, #tpu.memory_space<vmem>>, vector<1x1xf32>,
    } else {
    }
    %c0 = arith.constant 0 : index
    %c0_1 = arith.constant 0 : index
    %c0_2 = arith.constant 0 : index
    %3 = vector.load %arg5[%c0, %c0_1, %c0_2] : memref<1x1x1024xi32, #tpu.memory_space<vmem>>, vector<1x1x1024xi32>
    %4 = vector.shape_cast %3 : vector<1x1x1024xi32> to vector<1x1024xi32>
    %c0_i32_3 = arith.constant 0 : i32
    %5 = vector.broadcast %c0_i32_3 : i32 to vector<1x1024xi32>
    %6 = arith.cmpi sgt, %4, %5 : vector<1x1024xi32>
    %7 = arith.extui %6 : vector<1x1024xi1> to vector<1x1024xi32>
    %8 = arith.sitofp %7 : vector<1x1024xi32> to vector<1x1024xf32>
    %c0_4 = arith.constant 0 : index
    %c0_5 = arith.constant 0 : index
    %c0_6 = arith.constant 0 : index
    %9 = vector.load %arg4[%c0_4, %c0_5, %c0_6] : memref<1x1024x21xf32, #tpu.memory_space<vmem>>, vector<1x1024x21xf32>
    %10 = vector.shape_cast %9 : vector<1x1024x21xf32> to vector<1024x21xf32>
    %11 = tpu.transpose %10, [1, 0] : vector<1024x21xf32> -> vector<21x1024xf32>
    %cst = arith.constant dense<0xFF800000> : vector<1024xf32>
    %12 = vector.multi_reduction <maximumf>, %11, %cst [0] : vector<21x1024xf32> to vector<1024xf32>
    %13 = vector.shape_cast %12 : vector<1024xf32> to vector<1x1024xf32>
    %14 = vector.broadcast %13 : vector<1x1024xf32> to vector<21x1024xf32>
    %15 = arith.subf %11, %14 : vector<21x1024xf32>
    %16 = math.exp %15 : vector<21x1024xf32>
    %cst_7 = arith.constant dense<0.000000e+00> : vector<1024xf32>
    %17 = vector.multi_reduction <add>, %16, %cst_7 [0] : vector<21x1024xf32> to vector<1024xf32>
    %18 = vector.shape_cast %17 : vector<1024xf32> to vector<1x1024xf32>
    %19 = math.log %18 : vector<1x1024xf32>
    %20 = tpu.iota {dimensions = array<i32: 0>} : vector<21x1024xi32>
    %21 = vector.broadcast %4 : vector<1x1024xi32> to vector<21x1024xi32>
    %22 = arith.cmpi eq, %20, %21 : vector<21x1024xi32>
    %cst_8 = arith.constant 0.000000e+00 : f32
    %23 = vector.broadcast %cst_8 : f32 to vector<21x1024xf32>
    %24 = arith.select %22, %15, %23 : vector<21x1024xi1>, vector<21x1024xf32>
    %cst_9 = arith.constant dense<0.000000e+00> : vector<1024xf32>
    %25 = vector.multi_reduction <add>, %24, %cst_9 [0] : vector<21x1024xf32> to vector<1024xf32>
    %26 = vector.shape_cast %25 : vector<1024xf32> to vector<1x1024xf32>
    %27 = arith.subf %19, %26 : vector<1x1024xf32>
    %c0_10 = arith.constant 0 : index
    %c0_11 = arith.constant 0 : index
    %28 = vector.load %arg8[%c0_10, %c0_11] : memref<1x1xf32, #tpu.memory_space<vmem>>, vector<1x1xf32>
    %29 = vector.shape_cast %8 : vector<1x1024xf32> to vector<1x1x1024xf32>
    %cst_12 = arith.constant dense<0.000000e+00> : vector<1xf32>
    %30 = vector.multi_reduction <add>, %29, %cst_12 [1, 2] : vector<1x1x1024xf32> to vector<1xf32>
    %31 = vector.shape_cast %30 : vector<1xf32> to vector<1x1x1xf32>
    %32 = vector.extract %31[0, 0, 0] : f32 from vector<1x1x1xf32>
    %33 = vector.broadcast %32 : f32 to vector<1x1xf32>
    %34 = arith.addf %28, %33 : vector<1x1xf32>
    %c0_13 = arith.constant 0 : index
    %c0_14 = arith.constant 0 : index
    %35 = vector.load %arg8[%c0_13, %c0_14] : memref<1x1xf32, #tpu.memory_space<vmem>>, vector<1x1xf32>
    tpu.vector_store %arg8[%c0_13, %c0_14], %34 {strides = array<i32>} : memref<1x1xf32, #tpu.memory_space<vmem>>, vector<1x1xf32>,
    %c0_15 = arith.constant 0 : index
    %c0_16 = arith.constant 0 : index
    %36 = vector.load %arg10[%c0_15, %c0_16] : memref<1x1xf32, #tpu.memory_space<vmem>>, vector<1x1xf32>
    %37 = arith.mulf %8, %27 : vector<1x1024xf32>
    %38 = vector.shape_cast %37 : vector<1x1024xf32> to vector<1x1x1024xf32>
    %cst_17 = arith.constant dense<0.000000e+00> : vector<1xf32>
    %39 = vector.multi_reduction <add>, %38, %cst_17 [1, 2] : vector<1x1x1024xf32> to vector<1xf32>
    %40 = vector.shape_cast %39 : vector<1xf32> to vector<1x1x1xf32>
    %41 = vector.extract %40[0, 0, 0] : f32 from vector<1x1x1xf32>
    %42 = vector.broadcast %41 : f32 to vector<1x1xf32>
    %43 = arith.addf %36, %42 : vector<1x1xf32>
    %c0_18 = arith.constant 0 : index
    %c0_19 = arith.constant 0 : index
    %44 = vector.load %arg10[%c0_18, %c0_19] : memref<1x1xf32, #tpu.memory_space<vmem>>, vector<1x1xf32>
    tpu.vector_store %arg10[%c0_18, %c0_19], %43 {strides = array<i32>} : memref<1x1xf32, #tpu.memory_space<vmem>>, vector<1x1xf32>,
    %cst_20 = arith.constant 0.000000e+00 : f32
    %45 = vector.broadcast %cst_20 : f32 to vector<1x1024xf32>
    %46 = arith.select %6, %45, %27 : vector<1x1024xi1>, vector<1x1024xf32>
    %47 = arith.index_cast %arg1 : i32 to index
    %c0_21 = arith.constant 0 : index
    %48 = vector.load %arg7[%47, %c0_21] : memref<1x1024xf32, #tpu.memory_space<vmem>>, vector<1x1024xf32>
    tpu.vector_store %arg7[%47, %c0_21], %46 {strides = array<i32>} : memref<1x1024xf32, #tpu.memory_space<vmem>>, vector<1x1024xf32>,
    %c0_22 = arith.constant 0 : index
    %c0_23 = arith.constant 0 : index
    %c0_24 = arith.constant 0 : index
    %49 = vector.load %arg2[%c0_22, %c0_23, %c0_24] : memref<1x1024x4xf32, #tpu.memory_space<vmem>>, vector<1x1024x4xf32>
    %50 = vector.shape_cast %49 : vector<1x1024x4xf32> to vector<1024x4xf32>
    %c0_25 = arith.constant 0 : index
    %c0_26 = arith.constant 0 : index
    %c0_27 = arith.constant 0 : index
    %51 = vector.load %arg3[%c0_25, %c0_26, %c0_27] : memref<1x1024x4xf32, #tpu.memory_space<vmem>>, vector<1x1024x4xf32>
    %52 = vector.shape_cast %51 : vector<1x1024x4xf32> to vector<1024x4xf32>
    %53 = arith.subf %50, %52 : vector<1024x4xf32>
    %54 = tpu.transpose %53, [1, 0] : vector<1024x4xf32> -> vector<4x1024xf32>
    %55 = math.absf %54 : vector<4x1024xf32>
    %cst_28 = arith.constant 1.000000e+00 : f32
    %56 = vector.broadcast %cst_28 : f32 to vector<4x1024xf32>
    %57 = arith.cmpf olt, %55, %56 : vector<4x1024xf32>
    %cst_29 = arith.constant 5.000000e-01 : f32
    %58 = vector.broadcast %cst_29 : f32 to vector<4x1024xf32>
    %59 = arith.mulf %58, %54 : vector<4x1024xf32>
    %60 = arith.mulf %59, %54 : vector<4x1024xf32>
    %cst_30 = arith.constant 5.000000e-01 : f32
    %61 = vector.broadcast %cst_30 : f32 to vector<4x1024xf32>
    %62 = arith.subf %55, %61 : vector<4x1024xf32>
    %63 = arith.select %57, %60, %62 : vector<4x1024xi1>, vector<4x1024xf32>
    %cst_31 = arith.constant dense<0.000000e+00> : vector<1024xf32>
    %64 = vector.multi_reduction <add>, %63, %cst_31 [0] : vector<4x1024xf32> to vector<1024xf32>
    %65 = vector.shape_cast %64 : vector<1024xf32> to vector<1x1024xf32>
    %c0_32 = arith.constant 0 : index
    %c0_33 = arith.constant 0 : index
    %66 = vector.load %arg9[%c0_32, %c0_33] : memref<1x1xf32, #tpu.memory_space<vmem>>, vector<1x1xf32>
    %67 = arith.mulf %8, %65 : vector<1x1024xf32>
    %68 = vector.shape_cast %67 : vector<1x1024xf32> to vector<1x1x1024xf32>
    %cst_34 = arith.constant dense<0.000000e+00> : vector<1xf32>
    %69 = vector.multi_reduction <add>, %68, %cst_34 [1, 2] : vector<1x1x1024xf32> to vector<1xf32>
    %70 = vector.shape_cast %69 : vector<1xf32> to vector<1x1x1xf32>
    %71 = vector.extract %70[0, 0, 0] : f32 from vector<1x1x1xf32>
    %72 = vector.broadcast %71 : f32 to vector<1x1xf32>
    %73 = arith.addf %66, %72 : vector<1x1xf32>
    %c0_35 = arith.constant 0 : index
    %c0_36 = arith.constant 0 : index
    %74 = vector.load %arg9[%c0_35, %c0_36] : memref<1x1xf32, #tpu.memory_space<vmem>>, vector<1x1xf32>
    tpu.vector_store %arg9[%c0_35, %c0_36], %73 {strides = array<i32>} : memref<1x1xf32, #tpu.memory_space<vmem>>, vector<1x1xf32>,
    %c0_i32_37 = arith.constant 0 : i32
    %75 = arith.cmpi eq, %arg1, %c0_i32_37 : i32
    %76 = arith.extui %75 : i1 to i32
    %c0_i32_38 = arith.constant 0 : i32
    %77 = arith.cmpi ne, %76, %c0_i32_38 : i32
    scf.if %77 {
      %c0_39 = arith.constant 0 : index
      %c0_40 = arith.constant 0 : index
      %78 = vector.load %arg8[%c0_39, %c0_40] : memref<1x1xf32, #tpu.memory_space<vmem>>, vector<1x1xf32>
      %cst_41 = arith.constant 3.000000e+00 : f32
      %79 = vector.broadcast %cst_41 : f32 to vector<1x1xf32>
      %80 = arith.mulf %78, %79 : vector<1x1xf32>
      %cst_42 = arith.constant 1.024000e+03 : f32
      %81 = vector.broadcast %cst_42 : f32 to vector<1x1xf32>
      %82 = arith.minimumf %80, %81 : vector<1x1xf32>
      %c0_i32_43 = arith.constant 0 : i32
      %83 = vector.broadcast %c0_i32_43 : i32 to vector<1x1xi32>
      %c2139095040_i32 = arith.constant 2139095040 : i32
      %84 = vector.broadcast %c2139095040_i32 : i32 to vector<1x1xi32>
      %c0_i32_44 = arith.constant 0 : i32
      %c32_i32 = arith.constant 32 : i32
      %85 = arith.addi %c0_i32_44, %c32_i32 : i32
      %c1_i32 = arith.constant 1 : i32
      %86:2 = scf.for %arg11 = %c0_i32_44 to %85 step %c1_i32 iter_args(%arg12 = %83, %arg13 = %84) -> (vector<1x1xi32>, vector<1x1xi32>)  : i32 {
        %138 = arith.subi %arg13, %arg12 : vector<1x1xi32>
        %c1_i32_64 = arith.constant 1 : i32
        %139 = vector.broadcast %c1_i32_64 : i32 to vector<1x1xi32>
        %140 = arith.addi %138, %139 : vector<1x1xi32>
        %c1_i32_65 = arith.constant 1 : i32
        %141 = vector.broadcast %c1_i32_65 : i32 to vector<1x1xi32>
        %142 = arith.shrsi %140, %141 : vector<1x1xi32>
        %143 = arith.addi %arg12, %142 : vector<1x1xi32>
        %144 = tpu.bitcast %143 : vector<1x1xi32> -> vector<1x1xf32>
        %c0_66 = arith.constant 0 : index
        %c0_67 = arith.constant 0 : index
        %145 = vector.load %arg7[%c0_66, %c0_67] : memref<1x1024xf32, #tpu.memory_space<vmem>>, vector<1x1024xf32>
        %146 = vector.broadcast %144 : vector<1x1xf32> to vector<1x1024xf32>
        %147 = arith.cmpf oge, %145, %146 : vector<1x1024xf32>
        %148 = arith.extui %147 : vector<1x1024xi1> to vector<1x1024xi32>
        %149 = arith.sitofp %148 : vector<1x1024xi32> to vector<1x1024xf32>
        %150 = vector.shape_cast %149 : vector<1x1024xf32> to vector<1x1x1024xf32>
        %cst_68 = arith.constant dense<0.000000e+00> : vector<1xf32>
        %151 = vector.multi_reduction <add>, %150, %cst_68 [1, 2] : vector<1x1x1024xf32> to vector<1xf32>
        %152 = vector.shape_cast %151 : vector<1xf32> to vector<1x1x1xf32>
        %153 = vector.extract %152[0, 0, 0] : f32 from vector<1x1x1xf32>
        %154 = vector.broadcast %153 : f32 to vector<1x1xf32>
        %155 = arith.cmpf oge, %154, %82 : vector<1x1xf32>
        %156 = arith.select %155, %143, %arg12 : vector<1x1xi1>, vector<1x1xi32>
        %c1_i32_69 = arith.constant 1 : i32
        %157 = vector.broadcast %c1_i32_69 : i32 to vector<1x1xi32>
        %158 = arith.subi %143, %157 : vector<1x1xi32>
        %159 = arith.select %155, %arg13, %158 : vector<1x1xi1>, vector<1x1xi32>
        scf.yield %156, %159 : vector<1x1xi32>, vector<1x1xi32>
      }
      %87 = tpu.bitcast %86#0 : vector<1x1xi32> -> vector<1x1xf32>
      %c0_45 = arith.constant 0 : index
      %c0_46 = arith.constant 0 : index
      %88 = vector.load %arg7[%c0_45, %c0_46] : memref<1x1024xf32, #tpu.memory_space<vmem>>, vector<1x1024xf32>
      %89 = vector.broadcast %87 : vector<1x1xf32> to vector<1x1024xf32>
      %90 = arith.cmpf ogt, %88, %89 : vector<1x1024xf32>
      %cst_47 = arith.constant 0.000000e+00 : f32
      %91 = vector.broadcast %cst_47 : f32 to vector<1x1024xf32>
      %92 = arith.select %90, %88, %91 : vector<1x1024xi1>, vector<1x1024xf32>
      %93 = vector.shape_cast %92 : vector<1x1024xf32> to vector<1x1x1024xf32>
      %cst_48 = arith.constant dense<0.000000e+00> : vector<1xf32>
      %94 = vector.multi_reduction <add>, %93, %cst_48 [1, 2] : vector<1x1x1024xf32> to vector<1xf32>
      %95 = vector.shape_cast %94 : vector<1xf32> to vector<1x1x1xf32>
      %96 = vector.extract %95[0, 0, 0] : f32 from vector<1x1x1xf32>
      %97 = vector.broadcast %96 : f32 to vector<1x1xf32>
      %98 = arith.extui %90 : vector<1x1024xi1> to vector<1x1024xi32>
      %99 = arith.sitofp %98 : vector<1x1024xi32> to vector<1x1024xf32>
      %100 = vector.shape_cast %99 : vector<1x1024xf32> to vector<1x1x1024xf32>
      %cst_49 = arith.constant dense<0.000000e+00> : vector<1xf32>
      %101 = vector.multi_reduction <add>, %100, %cst_49 [1, 2] : vector<1x1x1024xf32> to vector<1xf32>
      %102 = vector.shape_cast %101 : vector<1xf32> to vector<1x1x1xf32>
      %103 = vector.extract %102[0, 0, 0] : f32 from vector<1x1x1xf32>
      %104 = vector.broadcast %103 : f32 to vector<1x1xf32>
      %105 = arith.subf %82, %104 : vector<1x1xf32>
      %cst_50 = arith.constant 0.000000e+00 : f32
      %106 = vector.broadcast %cst_50 : f32 to vector<1x1xf32>
      %107 = arith.cmpf ogt, %105, %106 : vector<1x1xf32>
      %108 = arith.mulf %105, %87 : vector<1x1xf32>
      %cst_51 = arith.constant 0.000000e+00 : f32
      %109 = vector.broadcast %cst_51 : f32 to vector<1x1xf32>
      %110 = arith.select %107, %108, %109 : vector<1x1xi1>, vector<1x1xf32>
      %111 = arith.addf %97, %110 : vector<1x1xf32>
      %c0_52 = arith.constant 0 : index
      %c0_53 = arith.constant 0 : index
      %112 = vector.load %arg10[%c0_52, %c0_53] : memref<1x1xf32, #tpu.memory_space<vmem>>, vector<1x1xf32>
      %113 = arith.addf %112, %111 : vector<1x1xf32>
      %114 = tpu.iota {dimensions = array<i32: 1>} : vector<1x128xi32>
      %c0_i32_54 = arith.constant 0 : i32
      %115 = vector.broadcast %c0_i32_54 : i32 to vector<1x128xi32>
      %116 = arith.cmpi eq, %114, %115 : vector<1x128xi32>
      %cst_55 = arith.constant 0.000000e+00 : f32
      %117 = vector.shape_cast %78 : vector<1x1xf32> to vector<1x1xf32>
      %118 = vector.broadcast %117 : vector<1x1xf32> to vector<1x128xf32>
      %119 = vector.broadcast %cst_55 : f32 to vector<1x128xf32>
      %120 = arith.select %116, %118, %119 : vector<1x128xi1>, vector<1x128xf32>
      %c1_i32_56 = arith.constant 1 : i32
      %121 = vector.broadcast %c1_i32_56 : i32 to vector<1x128xi32>
      %122 = arith.cmpi eq, %114, %121 : vector<1x128xi32>
      %c0_57 = arith.constant 0 : index
      %c0_58 = arith.constant 0 : index
      %123 = vector.load %arg9[%c0_57, %c0_58] : memref<1x1xf32, #tpu.memory_space<vmem>>, vector<1x1xf32>
      %cst_59 = arith.constant 0.000000e+00 : f32
      %124 = vector.shape_cast %123 : vector<1x1xf32> to vector<1x1xf32>
      %125 = vector.broadcast %124 : vector<1x1xf32> to vector<1x128xf32>
      %126 = vector.broadcast %cst_59 : f32 to vector<1x128xf32>
      %127 = arith.select %122, %125, %126 : vector<1x128xi1>, vector<1x128xf32>
      %128 = arith.addf %120, %127 : vector<1x128xf32>
      %c2_i32 = arith.constant 2 : i32
      %129 = vector.broadcast %c2_i32 : i32 to vector<1x128xi32>
      %130 = arith.cmpi eq, %114, %129 : vector<1x128xi32>
      %cst_60 = arith.constant 0.000000e+00 : f32
      %131 = vector.shape_cast %113 : vector<1x1xf32> to vector<1x1xf32>
      %132 = vector.broadcast %131 : vector<1x1xf32> to vector<1x128xf32>
      %133 = vector.broadcast %cst_60 : f32 to vector<1x128xf32>
      %134 = arith.select %130, %132, %133 : vector<1x128xi1>, vector<1x128xf32>
      %135 = arith.addf %128, %134 : vector<1x128xf32>
      %136 = vector.shape_cast %135 : vector<1x128xf32> to vector<1x1x128xf32>
      %c0_61 = arith.constant 0 : index
      %c0_62 = arith.constant 0 : index
      %c0_63 = arith.constant 0 : index
      %137 = vector.load %arg6[%c0_61, %c0_62, %c0_63] : memref<1x1x128xf32, #tpu.memory_space<vmem>>, vector<1x1x128xf32>
      tpu.vector_store %arg6[%c0_61, %c0_62, %c0_63], %136 {strides = array<i32>} : memref<1x1x128xf32, #tpu.memory_space<vmem>>, vector<1x1x128xf32>,
    } else {
    }
    return
  }
  func.func @transform_0(%arg0: i32, %arg1: i32) -> (i32, i32, i32) {
    %c0_i32 = arith.constant 0 : i32
    %c0_i32_0 = arith.constant 0 : i32
    return %arg0, %arg1, %c0_i32 : i32, i32, i32
  }
  func.func @transform_1(%arg0: i32, %arg1: i32) -> (i32, i32, i32) {
    %c0_i32 = arith.constant 0 : i32
    %c0_i32_0 = arith.constant 0 : i32
    return %arg0, %arg1, %c0_i32 : i32, i32, i32
  }
  func.func @transform_2(%arg0: i32, %arg1: i32) -> (i32, i32, i32) {
    %c0_i32 = arith.constant 0 : i32
    %c0_i32_0 = arith.constant 0 : i32
    return %arg0, %arg1, %c0_i32 : i32, i32, i32
  }
  func.func @transform_3(%arg0: i32, %arg1: i32) -> (i32, i32, i32) {
    %c0_i32 = arith.constant 0 : i32
    %c0_i32_0 = arith.constant 0 : i32
    return %arg0, %c0_i32, %arg1 : i32, i32, i32
  }
  func.func @transform_4(%arg0: i32, %arg1: i32) -> (i32, i32, i32) {
    %c0_i32 = arith.constant 0 : i32
    %c0_i32_0 = arith.constant 0 : i32
    %c0_i32_1 = arith.constant 0 : i32
    return %arg0, %c0_i32, %c0_i32_0 : i32, i32, i32
  }
}

</mosaic_0001>

<llo_original>
// kernel: tpu_custom_call.1
$region0: #{tpu_custom_call.1}
  #allocation0 [shape = 'u32[]', space=smem, size = 0x4, offset = 0x4, fixed_abs, tag = 'smem constant byte address 0x4 - core index']
  #allocation1 [shape = 'u32[144,128]{1,0:T(1,128)}', space=vmem, size = 0x12000, scoped, tag = 'internal scratch']
  #allocation2 [shape = 'f32[1,1024]{1,0:T(1,128)}', space=vmem, size = 0x1000, scoped, tag = 'scratch operand']
  #allocation3 [shape = 'f32[1,1]{1,0:T(1,128)}', space=vmem, size = 0x200, scoped, tag = 'scratch operand']
  #allocation4 [shape = 'f32[1,1]{1,0:T(1,128)}', space=vmem, size = 0x200, scoped, tag = 'scratch operand']
  #allocation5 [shape = 'f32[1,1]{1,0:T(1,128)}', space=vmem, size = 0x200, scoped, tag = 'scratch operand']
  %s0 = inlined_call_operand.vmem [shape: f32[2,1024,4], index: 0, kind: input, shape index: {}]
  %s1 = inlined_call_operand.vmem [shape: f32[2,1024,4], index: 1, kind: input, shape index: {}]
  %s2 = inlined_call_operand.vmem [shape: f32[2,1024,21], index: 2, kind: input, shape index: {}]
  %s3 = inlined_call_operand.vmem [shape: s32[2,1,1024], index: 3, kind: input, shape index: {}]
  %s4 = inlined_call_operand.hbm [shape: f32[2,1,128], index: 4, kind: output, shape index: {}]
  %s5 = sld [smem:[#allocation0]]
  $region64: #{tpu_custom_call.1} parent=0
    _
  %s7 = ssub.s32 1, %s5
  %s8 = scalar_select 0, %s7, %s5
  $region1: #{tpu_custom_call.1} parent=0
    #allocation6 [shape = 'u8[1024]{0}', space=vmem, size = 0x400, scoped, tag = 'output window, operand 0']
    #allocation7 [shape = 's32[2]{0}', space=sflag, size = 0x8, scoped, tag = 'scoped memory for tpu_custom_call.1']
    %9 = vsyncpa [#allocation7], 0
    %s10 = scalar_lea.sflag [#allocation7], 1
    %11 = vsyncpa %s10, 0
    loop: start=0, step=1, limit=4
    $region2: #{tpu_custom_call.1} parent=1 // loop_pre_header
      _
    $region3: #{tpu_custom_call.1} parent=1 // loop_header
      %s13 = sphi 0, %s17
      %p14 = scmp.ge.s32.totalorder %s13, 4
      %s20 = sphi 0, %s32
      %s21 = sphi 0, %s28
      %s22 = sphi 0, %s20
      %s23 = sphi 0, %s21
      %s24 = sphi 0, %s22
      %s25 = sphi 0, %s23
      %s37 = sphi 0, %s39
      %s40 = sphi 0, %s37
      %s41 = sphi 0, %s40
      %s57 = sphi 0, %s41
      %s65 = sphi 0, %s67
      %s68 = sphi 0, %s65
      %s69 = sphi 0, %s68
      %s85 = sphi 0, %s69
      %s93 = sphi 0, %s95
      %s96 = sphi 0, %s93
      %s97 = sphi 0, %s96
      %s113 = sphi 0, %s97
      %s121 = sphi 0, %s123
      %s124 = sphi 0, %s121
      %s125 = sphi 0, %s124
      %s141 = sphi 0, %s125
      %s147 = sphi 0, %s149
      %s150 = sphi 0, %s147
      %s151 = sphi 0, %s150
      %s167 = sphi 0, %s151
    $region4: #{tpu_custom_call.1} parent=1 // loop_header_branch
      %16 = sbr.rel (%p14) target = $region8
    $region5: #{tpu_custom_call.1} parent=1 // loop_body
      %s18 = ssub.s32 %s13, 1
      %s19 = ssub.s32 %s13, 2
      %s26 = sadd.s32 1, %s21
      %p27 = scmp.ge.s32.totalorder %s26, 1
      %s28 = scalar_select %p27, 0, %s26
      %s29 = sadd.s32 1, %s20
      %s30 = scalar_select %p27, %s29, %s20
      %p31 = scmp.ge.s32.totalorder %s30, 2
      %s32 = scalar_select %p31, 0, %s30
      %s33 = ssub.s32 %s20, %s32
      %s34 = ssub.s32 %s21, %s28
      %s35 = sor.u32 %s33, %s34
      %p36 = scmp.eq.s32.totalorder %s35, 0
      %s38 = sadd.s32 %s37, 1
      %s39 = scalar_select %p36, %s37, %s38
      %p42 = pneg %p36
      %p43 = scmp.eq.s32.totalorder %s13, 1
      %p44 = por %p42, %p43
      %p45 = scmp.ne.s32.totalorder %s37, %s40
      %p46 = scmp.eq.s32.totalorder %s13, 0
      %p47 = por %p45, %p46
      %p48 = scmp.ne.s32.totalorder %s37, %s40
      %p49 = scmp.eq.s32.totalorder %s18, 1
      %p50 = por %p48, %p49
      %p51 = scmp.ne.s32.totalorder %s40, %s41
      %p52 = scmp.eq.s32.totalorder %s18, 0
      %p53 = por %p51, %p52
      %p54 = scmp.ne.s32.totalorder %s40, %s41
      %p55 = scmp.eq.s32.totalorder %s19, 1
      %p56 = por %p54, %p55
      %p58 = scmp.ne.s32.totalorder %s41, %s57
      %p59 = scmp.eq.s32.totalorder %s19, 0
      %p60 = por %p58, %p59
      %s61 = ssub.s32 %s20, %s32
      %s62 = ssub.s32 %s21, %s28
      %s63 = sor.u32 %s61, %s62
      %p64 = scmp.eq.s32.totalorder %s63, 0
      %s66 = sadd.s32 %s65, 1
      %s67 = scalar_select %p64, %s65, %s66
      %p70 = pneg %p64
      %p71 = scmp.eq.s32.totalorder %s13, 1
      %p72 = por %p70, %p71
      %p73 = scmp.ne.s32.totalorder %s65, %s68
      %p74 = scmp.eq.s32.totalorder %s13, 0
      %p75 = por %p73, %p74
      %p76 = scmp.ne.s32.totalorder %s65, %s68
      %p77 = scmp.eq.s32.totalorder %s18, 1
      %p78 = por %p76, %p77
      %p79 = scmp.ne.s32.totalorder %s68, %s69
      %p80 = scmp.eq.s32.totalorder %s18, 0
      %p81 = por %p79, %p80
      %p82 = scmp.ne.s32.totalorder %s68, %s69
      %p83 = scmp.eq.s32.totalorder %s19, 1
      %p84 = por %p82, %p83
      %p86 = scmp.ne.s32.totalorder %s69, %s85
      %p87 = scmp.eq.s32.totalorder %s19, 0
      %p88 = por %p86, %p87
      %s89 = ssub.s32 %s20, %s32
      %s90 = ssub.s32 %s21, %s28
      %s91 = sor.u32 %s89, %s90
      %p92 = scmp.eq.s32.totalorder %s91, 0
      %s94 = sadd.s32 %s93, 1
      %s95 = scalar_select %p92, %s93, %s94
      %p98 = pneg %p92
      %p99 = scmp.eq.s32.totalorder %s13, 1
      %p100 = por %p98, %p99
      %p101 = scmp.ne.s32.totalorder %s93, %s96
      %p102 = scmp.eq.s32.totalorder %s13, 0
      %p103 = por %p101, %p102
      %p104 = scmp.ne.s32.totalorder %s93, %s96
      %p105 = scmp.eq.s32.totalorder %s18, 1
      %p106 = por %p104, %p105
      %p107 = scmp.ne.s32.totalorder %s96, %s97
      %p108 = scmp.eq.s32.totalorder %s18, 0
      %p109 = por %p107, %p108
      %p110 = scmp.ne.s32.totalorder %s96, %s97
      %p111 = scmp.eq.s32.totalorder %s19, 1
      %p112 = por %p110, %p111
      %p114 = scmp.ne.s32.totalorder %s97, %s113
      %p115 = scmp.eq.s32.totalorder %s19, 0
      %p116 = por %p114, %p115
      %s117 = ssub.s32 %s20, %s32
      %s118 = ssub.s32 %s21, %s28
      %s119 = sor.u32 %s117, %s118
      %p120 = scmp.eq.s32.totalorder %s119, 0
      %s122 = sadd.s32 %s121, 1
      %s123 = scalar_select %p120, %s121, %s122
      %p126 = pneg %p120
      %p127 = scmp.eq.s32.totalorder %s13, 1
      %p128 = por %p126, %p127
      %p129 = scmp.ne.s32.totalorder %s121, %s124
      %p130 = scmp.eq.s32.totalorder %s13, 0
      %p131 = por %p129, %p130
      %p132 = scmp.ne.s32.totalorder %s121, %s124
      %p133 = scmp.eq.s32.totalorder %s18, 1
      %p134 = por %p132, %p133
      %p135 = scmp.ne.s32.totalorder %s124, %s125
      %p136 = scmp.eq.s32.totalorder %s18, 0
      %p137 = por %p135, %p136
      %p138 = scmp.ne.s32.totalorder %s124, %s125
      %p139 = scmp.eq.s32.totalorder %s19, 1
      %p140 = por %p138, %p139
      %p142 = scmp.ne.s32.totalorder %s125, %s141
      %p143 = scmp.eq.s32.totalorder %s19, 0
      %p144 = por %p142, %p143
      %s145 = ssub.s32 %s20, %s32
      %p146 = scmp.eq.s32.totalorder %s145, 0
      %s148 = sadd.s32 %s147, 1
      %s149 = scalar_select %p146, %s147, %s148
      %p152 = pneg %p146
      %p153 = scmp.eq.s32.totalorder %s13, 1
      %p154 = por %p152, %p153
      %p155 = scmp.ne.s32.totalorder %s147, %s150
      %p156 = scmp.eq.s32.totalorder %s13, 0
      %p157 = por %p155, %p156
      %p158 = scmp.ne.s32.totalorder %s147, %s150
      %p159 = scmp.eq.s32.totalorder %s18, 1
      %p160 = por %p158, %p159
      %p161 = scmp.ne.s32.totalorder %s150, %s151
      %p162 = scmp.eq.s32.totalorder %s18, 0
      %p163 = por %p161, %p162
      %p164 = scmp.ne.s32.totalorder %s150, %s151
      %p165 = scmp.eq.s32.totalorder %s19, 1
      %p166 = por %p164, %p165
      %p168 = scmp.ne.s32.totalorder %s151, %s167
      %p169 = scmp.eq.s32.totalorder %s19, 0
      %p170 = por %p168, %p169
      %p171 = scmp.le.s32.totalorder 1, %s13
      %p172 = scmp.lt.s32.totalorder %s13, 3
      %p173 = pnand %p171, %p172
      %p174 = pneg %p173
      // Predicated region
      $region9: #{tpu_custom_call.1} parent=5 // pred_check
        _
      $region10: #{tpu_custom_call.1} parent=5 // pred_check_branch
        %176 = sbr.rel (%p173) target = $region12
      $region11: #{tpu_custom_call.1} parent=5 // pred_region
        %s177 = ssub.s32 %s13, 1
      $region12: #{tpu_custom_call.1} parent=5 // pred_fallthru
        _
      %p178 = scmp.lt.s32.totalorder %s13, 2
      // Predicated region
      $region13: #{tpu_custom_call.1} parent=5 // pred_check
        %p179 = pneg %p178
      $region14: #{tpu_custom_call.1} parent=5 // pred_check_branch
        %181 = sbr.rel (%p179) target = $region16
      $region15: #{tpu_custom_call.1} parent=5 // pred_region
        // Predicated region
        $region17: #{tpu_custom_call.1} parent=15 // pred_check
          %p182 = pneg %p47
        $region18: #{tpu_custom_call.1} parent=15 // pred_check_branch
          %184 = sbr.rel (%p182) target = $region20
        $region19: #{tpu_custom_call.1} parent=15 // pred_region
          %s185 = smul.u32 128, %s21
          %p186 = scmp.lt.s32.totalorder %s20, 1
          %s187 = scalar_select %p186, %s20, 1
          %p188 = scmp.lt.s32.totalorder %s185, 127
          %s189 = scalar_select %p188, %s185, 127
          %s190 = smul.addr %s187, 128
          %s191 = sadd.s32 %s189, %s190
          %s192 = smul.addr %s191, 8
          %s193 = scalar_lea.vmem %s0, %s192
          %s194 = smul.u32 128, %s21
        $region20: #{tpu_custom_call.1} parent=15 // pred_fallthru
          _
        // Predicated region
        $region21: #{tpu_custom_call.1} parent=15 // pred_check
          %p195 = pneg %p75
        $region22: #{tpu_custom_call.1} parent=15 // pred_check_branch
          %197 = sbr.rel (%p195) target = $region24
        $region23: #{tpu_custom_call.1} parent=15 // pred_region
          %s198 = smul.u32 128, %s21
          %p199 = scmp.lt.s32.totalorder %s20, 1
          %s200 = scalar_select %p199, %s20, 1
          %p201 = scmp.lt.s32.totalorder %s198, 127
          %s202 = scalar_select %p201, %s198, 127
          %s203 = smul.addr %s200, 128
          %s204 = sadd.s32 %s202, %s203
          %s205 = smul.addr %s204, 8
          %s206 = scalar_lea.vmem %s1, %s205
          %s207 = smul.u32 128, %s21
        $region24: #{tpu_custom_call.1} parent=15 // pred_fallthru
          _
        // Predicated region
        $region25: #{tpu_custom_call.1} parent=15 // pred_check
          %p208 = pneg %p103
        $region26: #{tpu_custom_call.1} parent=15 // pred_check_branch
          %210 = sbr.rel (%p208) target = $region28
        $region27: #{tpu_custom_call.1} parent=15 // pred_region
          %s211 = smul.u32 128, %s21
          %p212 = scmp.lt.s32.totalorder %s20, 1
          %s213 = scalar_select %p212, %s20, 1
          %p214 = scmp.lt.s32.totalorder %s211, 127
          %s215 = scalar_select %p214, %s211, 127
          %s216 = smul.addr %s213, 128
          %s217 = sadd.s32 %s215, %s216
          %s218 = smul.addr %s217, 8
          %s219 = scalar_lea.vmem %s2, %s218
          %s220 = smul.u32 128, %s21
        $region28: #{tpu_custom_call.1} parent=15 // pred_fallthru
          _
        // Predicated region
        $region29: #{tpu_custom_call.1} parent=15 // pred_check
          %p221 = pneg %p131
        $region30: #{tpu_custom_call.1} parent=15 // pred_check_branch
          %223 = sbr.rel (%p221) target = $region32
        $region31: #{tpu_custom_call.1} parent=15 // pred_region
          %s224 = smul.u32 8, %s21
          %p225 = scmp.lt.s32.totalorder %s20, 1
          %s226 = scalar_select %p225, %s20, 1
          %p227 = scmp.lt.s32.totalorder %s224, 7
          %s228 = scalar_select %p227, %s224, 7
          %s229 = smul.addr %s226, 8
          %s230 = sadd.s32 %s228, %s229
          %s231 = scalar_lea.vmem %s3, %s230
          %s232 = smul.u32 8, %s21
        $region32: #{tpu_custom_call.1} parent=15 // pred_fallthru
          _
      $region16: #{tpu_custom_call.1} parent=5 // pred_fallthru
        _
      %p233 = scmp.le.s32.totalorder 1, %s13
      %p234 = scmp.lt.s32.totalorder %s13, 3
      %p235 = pnand %p233, %p234
      %p236 = pneg %p235
      // Predicated region
      $region33: #{tpu_custom_call.1} parent=5 // pred_check
        _
      $region34: #{tpu_custom_call.1} parent=5 // pred_check_branch
        %238 = sbr.rel (%p235) target = $region36
      $region35: #{tpu_custom_call.1} parent=5 // pred_region
        %s239 = ssub.s32 %s13, 1
        %s240 = smul.u32 128, %s23
        %p241 = scmp.lt.s32.totalorder %s22, 1
        %s242 = scalar_select %p241, %s22, 1
        %p243 = scmp.lt.s32.totalorder %s240, 127
        %s244 = scalar_select %p243, %s240, 127
        %s245 = smul.addr %s242, 128
        %s246 = sadd.s32 %s244, %s245
        %s247 = smul.addr %s246, 8
        %s248 = scalar_lea.vmem %s0, %s247
        %p249 = pneg %p53
        %p250 = pneg %p50
        %s251 = smul.u32 128, %s23
        %p252 = scmp.lt.s32.totalorder %s22, 1
        %s253 = scalar_select %p252, %s22, 1
        %p254 = scmp.lt.s32.totalorder %s251, 127
        %s255 = scalar_select %p254, %s251, 127
        %s256 = smul.addr %s253, 128
        %s257 = sadd.s32 %s255, %s256
        %s258 = smul.addr %s257, 8
        %s259 = scalar_lea.vmem %s1, %s258
        %p260 = pneg %p81
        %p261 = pneg %p78
        %s262 = smul.u32 128, %s23
        %p263 = scmp.lt.s32.totalorder %s22, 1
        %s264 = scalar_select %p263, %s22, 1
        %p265 = scmp.lt.s32.totalorder %s262, 127
        %s266 = scalar_select %p265, %s262, 127
        %s267 = smul.addr %s264, 128
        %s268 = sadd.s32 %s266, %s267
        %s269 = smul.addr %s268, 8
        %s270 = scalar_lea.vmem %s2, %s269
        %p271 = pneg %p109
        %p272 = pneg %p106
        %s273 = smul.u32 8, %s23
        %p274 = scmp.lt.s32.totalorder %s22, 1
        %s275 = scalar_select %p274, %s22, 1
        %p276 = scmp.lt.s32.totalorder %s273, 7
        %s277 = scalar_select %p276, %s273, 7
        %s278 = smul.addr %s275, 8
        %s279 = sadd.s32 %s277, %s278
        %s280 = scalar_lea.vmem %s3, %s279
        %p281 = pneg %p137
        %p282 = pneg %p134
        %p283 = pneg %p163
        %p284 = pneg %p160
        %s285 = sand.u32 %s150, 1
        %s286 = scalar_lea.sflag [#allocation7], %s285
        %s287 = sand.u32 %s150, 1
        %s288 = scalar_lea.vmem [#allocation6], %s287
        %s289 = smul.u32 128, %s23
        %p290 = scmp.lt.s32.totalorder %s22, 1
        %s291 = scalar_select %p290, %s22, 1
        %p292 = scmp.lt.s32.totalorder %s289, 127
        %s293 = scalar_select %p292, %s289, 127
        %s294 = smul.addr %s291, 128
        %s295 = sadd.s32 %s293, %s294
        %s296 = smul.addr %s295, 8
        %s297 = scalar_lea.vmem %s0, %s296
        %s298 = smul.u32 128, %s23
        %s299 = smul.u32 128, %s23
        %p300 = scmp.lt.s32.totalorder %s22, 1
        %s301 = scalar_select %p300, %s22, 1
        %p302 = scmp.lt.s32.totalorder %s299, 127
        %s303 = scalar_select %p302, %s299, 127
        %s304 = smul.addr %s301, 128
        %s305 = sadd.s32 %s303, %s304
        %s306 = smul.addr %s305, 8
        %s307 = scalar_lea.vmem %s1, %s306
        %s308 = smul.u32 128, %s23
        %s309 = smul.u32 128, %s23
        %p310 = scmp.lt.s32.totalorder %s22, 1
        %s311 = scalar_select %p310, %s22, 1
        %p312 = scmp.lt.s32.totalorder %s309, 127
        %s313 = scalar_select %p312, %s309, 127
        %s314 = smul.addr %s311, 128
        %s315 = sadd.s32 %s313, %s314
        %s316 = smul.addr %s315, 8
        %s317 = scalar_lea.vmem %s2, %s316
        %s318 = smul.u32 128, %s23
        %s319 = smul.u32 8, %s23
        %p320 = scmp.lt.s32.totalorder %s22, 1
        %s321 = scalar_select %p320, %s22, 1
        %p322 = scmp.lt.s32.totalorder %s319, 7
        %s323 = scalar_select %p322, %s319, 7
        %s324 = smul.addr %s321, 8
        %s325 = sadd.s32 %s323, %s324
        %s326 = scalar_lea.vmem %s3, %s325
        %s327 = smul.u32 8, %s23
        %p328 = scmp.eq.s32.totalorder %s23, 0
        // Predicated region
        $region37: #{tpu_custom_call.1} parent=35 // pred_check
          %p329 = pneg %p328
        $region38: #{tpu_custom_call.1} parent=35 // pred_check_branch
          %331 = sbr.rel (%p329) target = $region40
        $region39: #{tpu_custom_call.1} parent=35 // pred_region
          %vm332 = vcmask 0
          %333 = vst.msk [vmem:[#allocation3] sm:$0x1] %vm332, 0.0
          %334 = vst.msk [vmem:[#allocation4] sm:$0x1] %vm332, 0.0
          %335 = vst.msk [vmem:[#allocation5] sm:$0x1] %vm332, 0.0
        $region40: #{tpu_custom_call.1} parent=35 // pred_fallthru
          _
        %v336 = vld [vmem:[%s326] sm:$0xff]
        %vm337 = vcmp.gt.s32.totalorder %v336, 0
        %v338 = vsel %vm337, 1, 0
        %v339 = vcvt.s32.f32 %v338
        %v340 = vld [vmem:[%s317] sm:$0xff]
        %v341 = vld [vmem:[%s317 + $0x8] sm:$0xff]
        %v342 = vld [vmem:[%s317 + $0x10] sm:$0xff]
        %v343 = vld [vmem:[%s317 + $0x18] sm:$0xff]
        %v344 = vld [vmem:[%s317 + $0x20] sm:$0xff]
        %v345 = vld [vmem:[%s317 + $0x28] sm:$0xff]
        %v346 = vld [vmem:[%s317 + $0x30] sm:$0xff]
        %v347 = vld [vmem:[%s317 + $0x38] sm:$0xff]
        %v348 = vld [vmem:[%s317 + $0x40] sm:$0xff]
        %v349 = vld [vmem:[%s317 + $0x48] sm:$0xff]
        %v350 = vld [vmem:[%s317 + $0x50] sm:$0xff]
        %v351 = vld [vmem:[%s317 + $0x58] sm:$0xff]
        %v352 = vld [vmem:[%s317 + $0x60] sm:$0xff]
        %v353 = vld [vmem:[%s317 + $0x68] sm:$0xff]
        %v354 = vld [vmem:[%s317 + $0x70] sm:$0xff]
        %v355 = vld [vmem:[%s317 + $0x78] sm:$0xff]
        %v356 = vld [vmem:[%s317 + $0x80] sm:$0xff]
        %v357 = vld [vmem:[%s317 + $0x88] sm:$0xff]
        %v358 = vld [vmem:[%s317 + $0x90] sm:$0xff]
        %v359 = vld [vmem:[%s317 + $0x98] sm:$0xff]
        %v360 = vld [vmem:[%s317 + $0xa0] sm:$0xff]
        %v361 = vld [vmem:[%s317 + $0xa8] sm:$0xff]
        %v362 = vld [vmem:[%s317 + $0xb0] sm:$0xff]
        %v363 = vld [vmem:[%s317 + $0xb8] sm:$0xff]
        %v364 = vld [vmem:[%s317 + $0xc0] sm:$0xff]
        %v365 = vld [vmem:[%s317 + $0xc8] sm:$0xff]
        %v366 = vld [vmem:[%s317 + $0xd0] sm:$0xff]
        %v367 = vld [vmem:[%s317 + $0xd8] sm:$0xff]
        %v368 = vld [vmem:[%s317 + $0xe0] sm:$0xff]
        %v369 = vld [vmem:[%s317 + $0xe8] sm:$0xff]
        %v370 = vld [vmem:[%s317 + $0xf0] sm:$0xff]
        %v371 = vld [vmem:[%s317 + $0xf8] sm:$0xff]
        %v372 = vld [vmem:[%s317 + $0x100] sm:$0xff]
        %v373 = vld [vmem:[%s317 + $0x108] sm:$0xff]
        %v374 = vld [vmem:[%s317 + $0x110] sm:$0xff]
        %v375 = vld [vmem:[%s317 + $0x118] sm:$0xff]
        %v376 = vld [vmem:[%s317 + $0x120] sm:$0xff]
        %v377 = vld [vmem:[%s317 + $0x128] sm:$0xff]
        %v378 = vld [vmem:[%s317 + $0x130] sm:$0xff]
        %v379 = vld [vmem:[%s317 + $0x138] sm:$0xff]
        %v380 = vld [vmem:[%s317 + $0x140] sm:$0xff]
        %v381 = vld [vmem:[%s317 + $0x148] sm:$0xff]
        %v382 = vld [vmem:[%s317 + $0x150] sm:$0xff]
        %v383 = vld [vmem:[%s317 + $0x158] sm:$0xff]
        %v384 = vld [vmem:[%s317 + $0x160] sm:$0xff]
        %v385 = vld [vmem:[%s317 + $0x168] sm:$0xff]
        %v386 = vld [vmem:[%s317 + $0x170] sm:$0xff]
        %v387 = vld [vmem:[%s317 + $0x178] sm:$0xff]
        %v388 = vld [vmem:[%s317 + $0x180] sm:$0xff]
        %v389 = vld [vmem:[%s317 + $0x188] sm:$0xff]
        %v390 = vld [vmem:[%s317 + $0x190] sm:$0xff]
        %v391 = vld [vmem:[%s317 + $0x198] sm:$0xff]
        %v392 = vld [vmem:[%s317 + $0x1a0] sm:$0xff]
        %v393 = vld [vmem:[%s317 + $0x1a8] sm:$0xff]
        %v394 = vld [vmem:[%s317 + $0x1b0] sm:$0xff]
        %v395 = vld [vmem:[%s317 + $0x1b8] sm:$0xff]
        %v396 = vld [vmem:[%s317 + $0x1c0] sm:$0xff]
        %v397 = vld [vmem:[%s317 + $0x1c8] sm:$0xff]
        %v398 = vld [vmem:[%s317 + $0x1d0] sm:$0xff]
        %v399 = vld [vmem:[%s317 + $0x1d8] sm:$0xff]
        %v400 = vld [vmem:[%s317 + $0x1e0] sm:$0xff]
        %v401 = vld [vmem:[%s317 + $0x1e8] sm:$0xff]
        %v402 = vld [vmem:[%s317 + $0x1f0] sm:$0xff]
        %v403 = vld [vmem:[%s317 + $0x1f8] sm:$0xff]
        %v404 = vld [vmem:[%s317 + $0x200] sm:$0xff]
        %v405 = vld [vmem:[%s317 + $0x208] sm:$0xff]
        %v406 = vld [vmem:[%s317 + $0x210] sm:$0xff]
        %v407 = vld [vmem:[%s317 + $0x218] sm:$0xff]
        %v408 = vld [vmem:[%s317 + $0x220] sm:$0xff]
        %v409 = vld [vmem:[%s317 + $0x228] sm:$0xff]
        %v410 = vld [vmem:[%s317 + $0x230] sm:$0xff]
        %v411 = vld [vmem:[%s317 + $0x238] sm:$0xff]
        %v412 = vld [vmem:[%s317 + $0x240] sm:$0xff]
        %v413 = vld [vmem:[%s317 + $0x248] sm:$0xff]
        %v414 = vld [vmem:[%s317 + $0x250] sm:$0xff]
        %v415 = vld [vmem:[%s317 + $0x258] sm:$0xff]
        %v416 = vld [vmem:[%s317 + $0x260] sm:$0xff]
        %v417 = vld [vmem:[%s317 + $0x268] sm:$0xff]
        %v418 = vld [vmem:[%s317 + $0x270] sm:$0xff]
        %v419 = vld [vmem:[%s317 + $0x278] sm:$0xff]
        %v420 = vld [vmem:[%s317 + $0x280] sm:$0xff]
        %v421 = vld [vmem:[%s317 + $0x288] sm:$0xff]
        %v422 = vld [vmem:[%s317 + $0x290] sm:$0xff]
        %v423 = vld [vmem:[%s317 + $0x298] sm:$0xff]
        %v424 = vld [vmem:[%s317 + $0x2a0] sm:$0xff]
        %v425 = vld [vmem:[%s317 + $0x2a8] sm:$0xff]
        %v426 = vld [vmem:[%s317 + $0x2b0] sm:$0xff]
        %v427 = vld [vmem:[%s317 + $0x2b8] sm:$0xff]
        %v428 = vld [vmem:[%s317 + $0x2c0] sm:$0xff]
        %v429 = vld [vmem:[%s317 + $0x2c8] sm:$0xff]
        %v430 = vld [vmem:[%s317 + $0x2d0] sm:$0xff]
        %v431 = vld [vmem:[%s317 + $0x2d8] sm:$0xff]
        %v432 = vld [vmem:[%s317 + $0x2e0] sm:$0xff]
        %v433 = vld [vmem:[%s317 + $0x2e8] sm:$0xff]
        %v434 = vld [vmem:[%s317 + $0x2f0] sm:$0xff]
        %v435 = vld [vmem:[%s317 + $0x2f8] sm:$0xff]
        %v436 = vld [vmem:[%s317 + $0x300] sm:$0xff]
        %v437 = vld [vmem:[%s317 + $0x308] sm:$0xff]
        %v438 = vld [vmem:[%s317 + $0x310] sm:$0xff]
        %v439 = vld [vmem:[%s317 + $0x318] sm:$0xff]
        %v440 = vld [vmem:[%s317 + $0x320] sm:$0xff]
        %v441 = vld [vmem:[%s317 + $0x328] sm:$0xff]
        %v442 = vld [vmem:[%s317 + $0x330] sm:$0xff]
        %v443 = vld [vmem:[%s317 + $0x338] sm:$0xff]
        %v444 = vld [vmem:[%s317 + $0x340] sm:$0xff]
        %v445 = vld [vmem:[%s317 + $0x348] sm:$0xff]
        %v446 = vld [vmem:[%s317 + $0x350] sm:$0xff]
        %v447 = vld [vmem:[%s317 + $0x358] sm:$0xff]
        %v448 = vld [vmem:[%s317 + $0x360] sm:$0xff]
        %v449 = vld [vmem:[%s317 + $0x368] sm:$0xff]
        %v450 = vld [vmem:[%s317 + $0x370] sm:$0xff]
        %v451 = vld [vmem:[%s317 + $0x378] sm:$0xff]
        %v452 = vld [vmem:[%s317 + $0x380] sm:$0xff]
        %v453 = vld [vmem:[%s317 + $0x388] sm:$0xff]
        %v454 = vld [vmem:[%s317 + $0x390] sm:$0xff]
        %v455 = vld [vmem:[%s317 + $0x398] sm:$0xff]
        %v456 = vld [vmem:[%s317 + $0x3a0] sm:$0xff]
        %v457 = vld [vmem:[%s317 + $0x3a8] sm:$0xff]
        %v458 = vld [vmem:[%s317 + $0x3b0] sm:$0xff]
        %v459 = vld [vmem:[%s317 + $0x3b8] sm:$0xff]
        %v460 = vld [vmem:[%s317 + $0x3c0] sm:$0xff]
        %v461 = vld [vmem:[%s317 + $0x3c8] sm:$0xff]
        %v462 = vld [vmem:[%s317 + $0x3d0] sm:$0xff]
        %v463 = vld [vmem:[%s317 + $0x3d8] sm:$0xff]
        %v464 = vld [vmem:[%s317 + $0x3e0] sm:$0xff]
        %v465 = vld [vmem:[%s317 + $0x3e8] sm:$0xff]
        %v466 = vld [vmem:[%s317 + $0x3f0] sm:$0xff]
        %v467 = vld [vmem:[%s317 + $0x3f8] sm:$0xff]
        %468 = vxpose.xlu0.b32.start [1/16] %v340, 128
        %469 = vxpose.xlu0.b32.cont [2/16] %v341, 128
        %470 = vxpose.xlu0.b32.cont [3/16] %v342, 128
        %471 = vxpose.xlu0.b32.cont [4/16] %v343, 128
        %472 = vxpose.xlu0.b32.cont [5/16] %v344, 128
        %473 = vxpose.xlu0.b32.cont [6/16] %v345, 128
        %474 = vxpose.xlu0.b32.cont [7/16] %v346, 128
        %475 = vxpose.xlu0.b32.cont [8/16] %v347, 128
        %476 = vxpose.xlu0.b32.cont [9/16] %v348, 128
        %477 = vxpose.xlu0.b32.cont [10/16] %v349, 128
        %478 = vxpose.xlu0.b32.cont [11/16] %v350, 128
        %479 = vxpose.xlu0.b32.cont [12/16] %v351, 128
        %480 = vxpose.xlu0.b32.cont [13/16] %v352, 128
        %481 = vxpose.xlu0.b32.cont [14/16] %v353, 128
        %482 = vxpose.xlu0.b32.cont [15/16] %v354, 128
        %483 = vxpose.xlu0.b32.end [16/16] %v355, 128
        %v484 = vpop.trf.xlu0
        %v485 = vpop.trf.xlu0
        %v486 = vpop.trf.xlu0
        %v487 = vpop.trf.xlu0
        %v488 = vpop.trf.xlu0
        %v489 = vpop.trf.xlu0
        %v490 = vpop.trf.xlu0
        %v491 = vpop.trf.xlu0
        %v492 = vpop.trf.xlu0
        %v493 = vpop.trf.xlu0
        %v494 = vpop.trf.xlu0
        %v495 = vpop.trf.xlu0
        %v496 = vpop.trf.xlu0
        %v497 = vpop.trf.xlu0
        %v498 = vpop.trf.xlu0
        %v499 = vpop.trf.xlu0
        %500 = vxpose.xlu0.b32.start [1/16] %v356, 128
        %501 = vxpose.xlu0.b32.cont [2/16] %v357, 128
        %502 = vxpose.xlu0.b32.cont [3/16] %v358, 128
        %503 = vxpose.xlu0.b32.cont [4/16] %v359, 128
        %504 = vxpose.xlu0.b32.cont [5/16] %v360, 128
        %505 = vxpose.xlu0.b32.cont [6/16] %v361, 128
        %506 = vxpose.xlu0.b32.cont [7/16] %v362, 128
        %507 = vxpose.xlu0.b32.cont [8/16] %v363, 128
        %508 = vxpose.xlu0.b32.cont [9/16] %v364, 128
        %509 = vxpose.xlu0.b32.cont [10/16] %v365, 128
        %510 = vxpose.xlu0.b32.cont [11/16] %v366, 128
        %511 = vxpose.xlu0.b32.cont [12/16] %v367, 128
        %512 = vxpose.xlu0.b32.cont [13/16] %v368, 128
        %513 = vxpose.xlu0.b32.cont [14/16] %v369, 128
        %514 = vxpose.xlu0.b32.cont [15/16] %v370, 128
        %515 = vxpose.xlu0.b32.end [16/16] %v371, 128
        %v516 = vpop.trf.xlu0
        %v517 = vpop.trf.xlu0
        %v518 = vpop.trf.xlu0
        %v519 = vpop.trf.xlu0
        %v520 = vpop.trf.xlu0
        %v521 = vpop.trf.xlu0
        %v522 = vpop.trf.xlu0
        %v523 = vpop.trf.xlu0
        %v524 = vpop.trf.xlu0
        %v525 = vpop.trf.xlu0
        %v526 = vpop.trf.xlu0
        %v527 = vpop.trf.xlu0
        %v528 = vpop.trf.xlu0
        %v529 = vpop.trf.xlu0
        %v530 = vpop.trf.xlu0
        %v531 = vpop.trf.xlu0
        %532 = vxpose.xlu0.b32.start [1/16] %v372, 128
        %533 = vxpose.xlu0.b32.cont [2/16] %v373, 128
        %534 = vxpose.xlu0.b32.cont [3/16] %v374, 128
        %535 = vxpose.xlu0.b32.cont [4/16] %v375, 128
        %536 = vxpose.xlu0.b32.cont [5/16] %v376, 128
        %537 = vxpose.xlu0.b32.cont [6/16] %v377, 128
        %538 = vxpose.xlu0.b32.cont [7/16] %v378, 128
        %539 = vxpose.xlu0.b32.cont [8/16] %v379, 128
        %540 = vxpose.xlu0.b32.cont [9/16] %v380, 128
        %541 = vxpose.xlu0.b32.cont [10/16] %v381, 128
        %542 = vxpose.xlu0.b32.cont [11/16] %v382, 128
        %543 = vxpose.xlu0.b32.cont [12/16] %v383, 128
        %544 = vxpose.xlu0.b32.cont [13/16] %v384, 128
        %545 = vxpose.xlu0.b32.cont [14/16] %v385, 128
        %546 = vxpose.xlu0.b32.cont [15/16] %v386, 128
        %547 = vxpose.xlu0.b32.end [16/16] %v387, 128
        %v548 = vpop.trf.xlu0
        %v549 = vpop.trf.xlu0
        %v550 = vpop.trf.xlu0
        %v551 = vpop.trf.xlu0
        %v552 = vpop.trf.xlu0
        %v553 = vpop.trf.xlu0
        %v554 = vpop.trf.xlu0
        %v555 = vpop.trf.xlu0
        %v556 = vpop.trf.xlu0
        %v557 = vpop.trf.xlu0
        %v558 = vpop.trf.xlu0
        %v559 = vpop.trf.xlu0
        %v560 = vpop.trf.xlu0
        %v561 = vpop.trf.xlu0
        %v562 = vpop.trf.xlu0
        %v563 = vpop.trf.xlu0
        %564 = vxpose.xlu0.b32.start [1/16] %v388, 128
        %565 = vxpose.xlu0.b32.cont [2/16] %v389, 128
        %566 = vxpose.xlu0.b32.cont [3/16] %v390, 128
        %567 = vxpose.xlu0.b32.cont [4/16] %v391, 128
        %568 = vxpose.xlu0.b32.cont [5/16] %v392, 128
        %569 = vxpose.xlu0.b32.cont [6/16] %v393, 128
        %570 = vxpose.xlu0.b32.cont [7/16] %v394, 128
        %571 = vxpose.xlu0.b32.cont [8/16] %v395, 128
        %572 = vxpose.xlu0.b32.cont [9/16] %v396, 128
        %573 = vxpose.xlu0.b32.cont [10/16] %v397, 128
        %574 = vxpose.xlu0.b32.cont [11/16] %v398, 128
        %575 = vxpose.xlu0.b32.cont [12/16] %v399, 128
        %576 = vxpose.xlu0.b32.cont [13/16] %v400, 128
        %577 = vxpose.xlu0.b32.cont [14/16] %v401, 128
        %578 = vxpose.xlu0.b32.cont [15/16] %v402, 128
        %579 = vxpose.xlu0.b32.end [16/16] %v403, 128
        %v580 = vpop.trf.xlu0
        %v581 = vpop.trf.xlu0
        %v582 = vpop.trf.xlu0
        %v583 = vpop.trf.xlu0
        %v584 = vpop.trf.xlu0
        %v585 = vpop.trf.xlu0
        %v586 = vpop.trf.xlu0
        %v587 = vpop.trf.xlu0
        %v588 = vpop.trf.xlu0
        %v589 = vpop.trf.xlu0
        %v590 = vpop.trf.xlu0
        %v591 = vpop.trf.xlu0
        %v592 = vpop.trf.xlu0
        %v593 = vpop.trf.xlu0
        %v594 = vpop.trf.xlu0
        %v595 = vpop.trf.xlu0
        %596 = vxpose.xlu0.b32.start [1/16] %v404, 128
        %597 = vxpose.xlu0.b32.cont [2/16] %v405, 128
        %598 = vxpose.xlu0.b32.cont [3/16] %v406, 128
        %599 = vxpose.xlu0.b32.cont [4/16] %v407, 128
        %600 = vxpose.xlu0.b32.cont [5/16] %v408, 128
        %601 = vxpose.xlu0.b32.cont [6/16] %v409, 128
        %602 = vxpose.xlu0.b32.cont [7/16] %v410, 128
        %603 = vxpose.xlu0.b32.cont [8/16] %v411, 128
        %604 = vxpose.xlu0.b32.cont [9/16] %v412, 128
        %605 = vxpose.xlu0.b32.cont [10/16] %v413, 128
        %606 = vxpose.xlu0.b32.cont [11/16] %v414, 128
        %607 = vxpose.xlu0.b32.cont [12/16] %v415, 128
        %608 = vxpose.xlu0.b32.cont [13/16] %v416, 128
        %609 = vxpose.xlu0.b32.cont [14/16] %v417, 128
        %610 = vxpose.xlu0.b32.cont [15/16] %v418, 128
        %611 = vxpose.xlu0.b32.end [16/16] %v419, 128
        %v612 = vpop.trf.xlu0
        %v613 = vpop.trf.xlu0
        %v614 = vpop.trf.xlu0
        %v615 = vpop.trf.xlu0
        %v616 = vpop.trf.xlu0
        %v617 = vpop.trf.xlu0
        %v618 = vpop.trf.xlu0
        %v619 = vpop.trf.xlu0
        %v620 = vpop.trf.xlu0
        %v621 = vpop.trf.xlu0
        %v622 = vpop.trf.xlu0
        %v623 = vpop.trf.xlu0
        %v624 = vpop.trf.xlu0
        %v625 = vpop.trf.xlu0
        %v626 = vpop.trf.xlu0
        %v627 = vpop.trf.xlu0
        %628 = vxpose.xlu0.b32.start [1/16] %v420, 128
        %629 = vxpose.xlu0.b32.cont [2/16] %v421, 128
        %630 = vxpose.xlu0.b32.cont [3/16] %v422, 128
        %631 = vxpose.xlu0.b32.cont [4/16] %v423, 128
        %632 = vxpose.xlu0.b32.cont [5/16] %v424, 128
        %633 = vxpose.xlu0.b32.cont [6/16] %v425, 128
        %634 = vxpose.xlu0.b32.cont [7/16] %v426, 128
        %635 = vxpose.xlu0.b32.cont [8/16] %v427, 128
        %636 = vxpose.xlu0.b32.cont [9/16] %v428, 128
        %637 = vxpose.xlu0.b32.cont [10/16] %v429, 128
        %638 = vxpose.xlu0.b32.cont [11/16] %v430, 128
        %639 = vxpose.xlu0.b32.cont [12/16] %v431, 128
        %640 = vxpose.xlu0.b32.cont [13/16] %v432, 128
        %641 = vxpose.xlu0.b32.cont [14/16] %v433, 128
        %642 = vxpose.xlu0.b32.cont [15/16] %v434, 128
        %643 = vxpose.xlu0.b32.end [16/16] %v435, 128
        %v644 = vpop.trf.xlu0
        %v645 = vpop.trf.xlu0
        %v646 = vpop.trf.xlu0
        %v647 = vpop.trf.xlu0
        %v648 = vpop.trf.xlu0
        %v649 = vpop.trf.xlu0
        %v650 = vpop.trf.xlu0
        %v651 = vpop.trf.xlu0
        %v652 = vpop.trf.xlu0
        %v653 = vpop.trf.xlu0
        %v654 = vpop.trf.xlu0
        %v655 = vpop.trf.xlu0
        %v656 = vpop.trf.xlu0
        %v657 = vpop.trf.xlu0
        %v658 = vpop.trf.xlu0
        %v659 = vpop.trf.xlu0
        %660 = vxpose.xlu0.b32.start [1/16] %v436, 128
        %661 = vxpose.xlu0.b32.cont [2/16] %v437, 128
        %662 = vxpose.xlu0.b32.cont [3/16] %v438, 128
        %663 = vxpose.xlu0.b32.cont [4/16] %v439, 128
        %664 = vxpose.xlu0.b32.cont [5/16] %v440, 128
        %665 = vxpose.xlu0.b32.cont [6/16] %v441, 128
        %666 = vxpose.xlu0.b32.cont [7/16] %v442, 128
        %667 = vxpose.xlu0.b32.cont [8/16] %v443, 128
        %668 = vxpose.xlu0.b32.cont [9/16] %v444, 128
        %669 = vxpose.xlu0.b32.cont [10/16] %v445, 128
        %670 = vxpose.xlu0.b32.cont [11/16] %v446, 128
        %671 = vxpose.xlu0.b32.cont [12/16] %v447, 128
        %672 = vxpose.xlu0.b32.cont [13/16] %v448, 128
        %673 = vxpose.xlu0.b32.cont [14/16] %v449, 128
        %674 = vxpose.xlu0.b32.cont [15/16] %v450, 128
        %675 = vxpose.xlu0.b32.end [16/16] %v451, 128
        %v676 = vpop.trf.xlu0
        %v677 = vpop.trf.xlu0
        %v678 = vpop.trf.xlu0
        %v679 = vpop.trf.xlu0
        %v680 = vpop.trf.xlu0
        %v681 = vpop.trf.xlu0
        %v682 = vpop.trf.xlu0
        %v683 = vpop.trf.xlu0
        %v684 = vpop.trf.xlu0
        %v685 = vpop.trf.xlu0
        %v686 = vpop.trf.xlu0
        %v687 = vpop.trf.xlu0
        %v688 = vpop.trf.xlu0
        %v689 = vpop.trf.xlu0
        %v690 = vpop.trf.xlu0
        %v691 = vpop.trf.xlu0
        %692 = vxpose.xlu0.b32.start [1/16] %v452, 128
        %693 = vxpose.xlu0.b32.cont [2/16] %v453, 128
        %694 = vxpose.xlu0.b32.cont [3/16] %v454, 128
        %695 = vxpose.xlu0.b32.cont [4/16] %v455, 128
        %696 = vxpose.xlu0.b32.cont [5/16] %v456, 128
        %697 = vxpose.xlu0.b32.cont [6/16] %v457, 128
        %698 = vxpose.xlu0.b32.cont [7/16] %v458, 128
        %699 = vxpose.xlu0.b32.cont [8/16] %v459, 128
        %700 = vxpose.xlu0.b32.cont [9/16] %v460, 128
        %701 = vxpose.xlu0.b32.cont [10/16] %v461, 128
        %702 = vxpose.xlu0.b32.cont [11/16] %v462, 128
        %703 = vxpose.xlu0.b32.cont [12/16] %v463, 128
        %704 = vxpose.xlu0.b32.cont [13/16] %v464, 128
        %705 = vxpose.xlu0.b32.cont [14/16] %v465, 128
        %706 = vxpose.xlu0.b32.cont [15/16] %v466, 128
        %707 = vxpose.xlu0.b32.end [16/16] %v467, 128
        %v708 = vpop.trf.xlu0
        %v709 = vpop.trf.xlu0
        %v710 = vpop.trf.xlu0
        %v711 = vpop.trf.xlu0
        %v712 = vpop.trf.xlu0
        %v713 = vpop.trf.xlu0
        %v714 = vpop.trf.xlu0
        %v715 = vpop.trf.xlu0
        %v716 = vpop.trf.xlu0
        %v717 = vpop.trf.xlu0
        %v718 = vpop.trf.xlu0
        %v719 = vpop.trf.xlu0
        %v720 = vpop.trf.xlu0
        %v721 = vpop.trf.xlu0
        %v722 = vpop.trf.xlu0
        %v723 = vpop.trf.xlu0
        %v724 = vmax.f32 %v484, %v485
        %vm725 = vcmask 1044480
        %v726 = vsel %vm725, %v486, -inf
        %v727 = vmax.f32 %v724, %v726
        %v728 = vrot.slane %v727, 4
        %v729 = vmax.f32 %v727, %v728
        %v730 = vrot.slane %v729, 2
        %v731 = vmax.f32 %v729, %v730
        %v732 = vrot.slane %v731, 1
        %v733 = vmax.f32 %v731, %v732
        %v734 = vmax.f32 %v516, %v517
        %v735 = vsel %vm725, %v518, -inf
        %v736 = vmax.f32 %v734, %v735
        %v737 = vrot.slane %v736, 4
        %v738 = vmax.f32 %v736, %v737
        %v739 = vrot.slane %v738, 2
        %v740 = vmax.f32 %v738, %v739
        %v741 = vrot.slane %v740, 1
        %v742 = vmax.f32 %v740, %v741
        %v743 = vmax.f32 %v548, %v549
        %v744 = vsel %vm725, %v550, -inf
        %v745 = vmax.f32 %v743, %v744
        %v746 = vrot.slane %v745, 4
        %v747 = vmax.f32 %v745, %v746
        %v748 = vrot.slane %v747, 2
        %v749 = vmax.f32 %v747, %v748
        %v750 = vrot.slane %v749, 1
        %v751 = vmax.f32 %v749, %v750
        %v752 = vmax.f32 %v580, %v581
        %v753 = vsel %vm725, %v582, -inf
        %v754 = vmax.f32 %v752, %v753
        %v755 = vrot.slane %v754, 4
        %v756 = vmax.f32 %v754, %v755
        %v757 = vrot.slane %v756, 2
        %v758 = vmax.f32 %v756, %v757
        %v759 = vrot.slane %v758, 1
        %v760 = vmax.f32 %v758, %v759
        %v761 = vmax.f32 %v612, %v613
        %v762 = vsel %vm725, %v614, -inf
        %v763 = vmax.f32 %v761, %v762
        %v764 = vrot.slane %v763, 4
        %v765 = vmax.f32 %v763, %v764
        %v766 = vrot.slane %v765, 2
        %v767 = vmax.f32 %v765, %v766
        %v768 = vrot.slane %v767, 1
        %v769 = vmax.f32 %v767, %v768
        %v770 = vmax.f32 %v644, %v645
        %v771 = vsel %vm725, %v646, -inf
        %v772 = vmax.f32 %v770, %v771
        %v773 = vrot.slane %v772, 4
        %v774 = vmax.f32 %v772, %v773
        %v775 = vrot.slane %v774, 2
        %v776 = vmax.f32 %v774, %v775
        %v777 = vrot.slane %v776, 1
        %v778 = vmax.f32 %v776, %v777
        %v779 = vmax.f32 %v676, %v677
        %v780 = vsel %vm725, %v678, -inf
        %v781 = vmax.f32 %v779, %v780
        %v782 = vrot.slane %v781, 4
        %v783 = vmax.f32 %v781, %v782
        %v784 = vrot.slane %v783, 2
        %v785 = vmax.f32 %v783, %v784
        %v786 = vrot.slane %v785, 1
        %v787 = vmax.f32 %v785, %v786
        %v788 = vmax.f32 %v708, %v709
        %v789 = vsel %vm725, %v710, -inf
        %v790 = vmax.f32 %v788, %v789
        %v791 = vrot.slane %v790, 4
        %v792 = vmax.f32 %v790, %v791
        %v793 = vrot.slane %v792, 2
        %v794 = vmax.f32 %v792, %v793
        %v795 = vrot.slane %v794, 1
        %v796 = vmax.f32 %v794, %v795
        %v797 = vsub.f32 %v484, %v733
        %v798 = vsub.f32 %v516, %v742
        %v799 = vsub.f32 %v548, %v751
        %v800 = vsub.f32 %v580, %v760
        %v801 = vsub.f32 %v612, %v769
        %v802 = vsub.f32 %v644, %v778
        %v803 = vsub.f32 %v676, %v787
        %v804 = vsub.f32 %v708, %v796
        %v805 = vsub.f32 %v485, %v733
        %v806 = vsub.f32 %v517, %v742
        %v807 = vsub.f32 %v549, %v751
        %v808 = vsub.f32 %v581, %v760
        %v809 = vsub.f32 %v613, %v769
        %v810 = vsub.f32 %v645, %v778
        %v811 = vsub.f32 %v677, %v787
        %v812 = vsub.f32 %v709, %v796
        %v813 = vsub.f32 %v486, %v733
        %v814 = vsub.f32 %v518, %v742
        %v815 = vsub.f32 %v550, %v751
        %v816 = vsub.f32 %v582, %v760
        %v817 = vsub.f32 %v614, %v769
        %v818 = vsub.f32 %v646, %v778
        %v819 = vsub.f32 %v678, %v787
        %v820 = vsub.f32 %v710, %v796
        %v821 = vmul.f32 %v797, 1.442695
        %v822 = vpow.pop %v821
        %v823 = vmul.f32 %v798, 1.442695
        %v824 = vpow.pop %v823
        %v825 = vmul.f32 %v799, 1.442695
        %v826 = vpow.pop %v825
        %v827 = vmul.f32 %v800, 1.442695
        %v828 = vpow.pop %v827
        %v829 = vmul.f32 %v801, 1.442695
        %v830 = vpow.pop %v829
        %v831 = vmul.f32 %v802, 1.442695
        %v832 = vpow.pop %v831
        %v833 = vmul.f32 %v803, 1.442695
        %v834 = vpow.pop %v833
        %v835 = vmul.f32 %v804, 1.442695
        %v836 = vpow.pop %v835
        %v837 = vmul.f32 %v805, 1.442695
        %v838 = vpow.pop %v837
        %v839 = vmul.f32 %v806, 1.442695
        %v840 = vpow.pop %v839
        %v841 = vmul.f32 %v807, 1.442695
        %v842 = vpow.pop %v841
        %v843 = vmul.f32 %v808, 1.442695
        %v844 = vpow.pop %v843
        %v845 = vmul.f32 %v809, 1.442695
        %v846 = vpow.pop %v845
        %v847 = vmul.f32 %v810, 1.442695
        %v848 = vpow.pop %v847
        %v849 = vmul.f32 %v811, 1.442695
        %v850 = vpow.pop %v849
        %v851 = vmul.f32 %v812, 1.442695
        %v852 = vpow.pop %v851
        %v853 = vmul.f32 %v813, 1.442695
        %v854 = vpow.pop %v853
        %v855 = vmul.f32 %v814, 1.442695
        %v856 = vpow.pop %v855
        %v857 = vmul.f32 %v815, 1.442695
        %v858 = vpow.pop %v857
        %v859 = vmul.f32 %v816, 1.442695
        %v860 = vpow.pop %v859
        %v861 = vmul.f32 %v817, 1.442695
        %v862 = vpow.pop %v861
        %v863 = vmul.f32 %v818, 1.442695
        %v864 = vpow.pop %v863
        %v865 = vmul.f32 %v819, 1.442695
        %v866 = vpow.pop %v865
        %v867 = vmul.f32 %v820, 1.442695
        %v868 = vpow.pop %v867
        %v869 = vadd.f32 %v822, %v838
        %v870 = vsel %vm725, %v854, 0.0
        %v871 = vadd.f32 %v869, %v870
        %v872 = vrot.slane %v871, 4
        %v873 = vadd.f32 %v871, %v872
        %v874 = vrot.slane %v873, 2
        %v875 = vadd.f32 %v873, %v874
        %v876 = vrot.slane %v875, 1
        %v877 = vadd.f32 %v875, %v876
        %v878 = vadd.f32 %v824, %v840
        %v879 = vsel %vm725, %v856, 0.0
        %v880 = vadd.f32 %v878, %v879
        %v881 = vrot.slane %v880, 4
        %v882 = vadd.f32 %v880, %v881
        %v883 = vrot.slane %v882, 2
        %v884 = vadd.f32 %v882, %v883
        %v885 = vrot.slane %v884, 1
        %v886 = vadd.f32 %v884, %v885
        %v887 = vadd.f32 %v826, %v842
        %v888 = vsel %vm725, %v858, 0.0
        %v889 = vadd.f32 %v887, %v888
        %v890 = vrot.slane %v889, 4
        %v891 = vadd.f32 %v889, %v890
        %v892 = vrot.slane %v891, 2
        %v893 = vadd.f32 %v891, %v892
        %v894 = vrot.slane %v893, 1
        %v895 = vadd.f32 %v893, %v894
        %v896 = vadd.f32 %v828, %v844
        %v897 = vsel %vm725, %v860, 0.0
        %v898 = vadd.f32 %v896, %v897
        %v899 = vrot.slane %v898, 4
        %v900 = vadd.f32 %v898, %v899
        %v901 = vrot.slane %v900, 2
        %v902 = vadd.f32 %v900, %v901
        %v903 = vrot.slane %v902, 1
        %v904 = vadd.f32 %v902, %v903
        %v905 = vadd.f32 %v830, %v846
        %v906 = vsel %vm725, %v862, 0.0
        %v907 = vadd.f32 %v905, %v906
        %v908 = vrot.slane %v907, 4
        %v909 = vadd.f32 %v907, %v908
        %v910 = vrot.slane %v909, 2
        %v911 = vadd.f32 %v909, %v910
        %v912 = vrot.slane %v911, 1
        %v913 = vadd.f32 %v911, %v912
        %v914 = vadd.f32 %v832, %v848
        %v915 = vsel %vm725, %v864, 0.0
        %v916 = vadd.f32 %v914, %v915
        %v917 = vrot.slane %v916, 4
        %v918 = vadd.f32 %v916, %v917
        %v919 = vrot.slane %v918, 2
        %v920 = vadd.f32 %v918, %v919
        %v921 = vrot.slane %v920, 1
        %v922 = vadd.f32 %v920, %v921
        %v923 = vadd.f32 %v834, %v850
        %v924 = vsel %vm725, %v866, 0.0
        %v925 = vadd.f32 %v923, %v924
        %v926 = vrot.slane %v925, 4
        %v927 = vadd.f32 %v925, %v926
        %v928 = vrot.slane %v927, 2
        %v929 = vadd.f32 %v927, %v928
        %v930 = vrot.slane %v929, 1
        %v931 = vadd.f32 %v929, %v930
        %v932 = vadd.f32 %v836, %v852
        %v933 = vsel %vm725, %v868, 0.0
        %v934 = vadd.f32 %v932, %v933
        %v935 = vrot.slane %v934, 4
        %v936 = vadd.f32 %v934, %v935
        %v937 = vrot.slane %v936, 2
        %v938 = vadd.f32 %v936, %v937
        %v939 = vrot.slane %v938, 1
        %v940 = vadd.f32 %v938, %v939
        %v941 = vlog2.pop %v877
        %v942 = vmul.f32 %v941, 0.6931472
        %v943 = vlog2.pop %v886
        %v944 = vmul.f32 %v943, 0.6931472
        %v945 = vlog2.pop %v895
        %v946 = vmul.f32 %v945, 0.6931472
        %v947 = vlog2.pop %v904
        %v948 = vmul.f32 %v947, 0.6931472
        %v949 = vlog2.pop %v913
        %v950 = vmul.f32 %v949, 0.6931472
        %v951 = vlog2.pop %v922
        %v952 = vmul.f32 %v951, 0.6931472
        %v953 = vlog2.pop %v931
        %v954 = vmul.f32 %v953, 0.6931472
        %v955 = vlog2.pop %v940
        %v956 = vmul.f32 %v955, 0.6931472
        %v957 = vlaneseq
        %v958 = vshrl.u32 %v957, 7
        %v959 = vadd.s32 %v958, 8
        %v960 = vadd.s32 %v958, 16
        %v961 = vlaneseq
        %v962 = vshrl.u32 %v961, 7
        %v963 = vsub.s32 0, %v962
        %v964 = vrot.slane %v336, %v963
        %v965 = vlaneseq
        %v966 = vshrl.u32 %v965, 7
        %v967 = vsub.s32 1, %v966
        %v968 = vrot.slane %v336, %v967
        %v969 = vlaneseq
        %v970 = vshrl.u32 %v969, 7
        %v971 = vsub.s32 2, %v970
        %v972 = vrot.slane %v336, %v971
        %v973 = vlaneseq
        %v974 = vshrl.u32 %v973, 7
        %v975 = vsub.s32 3, %v974
        %v976 = vrot.slane %v336, %v975
        %v977 = vlaneseq
        %v978 = vshrl.u32 %v977, 7
        %v979 = vsub.s32 4, %v978
        %v980 = vrot.slane %v336, %v979
        %v981 = vlaneseq
        %v982 = vshrl.u32 %v981, 7
        %v983 = vsub.s32 5, %v982
        %v984 = vrot.slane %v336, %v983
        %v985 = vlaneseq
        %v986 = vshrl.u32 %v985, 7
        %v987 = vsub.s32 6, %v986
        %v988 = vrot.slane %v336, %v987
        %v989 = vlaneseq
        %v990 = vshrl.u32 %v989, 7
        %v991 = vsub.s32 7, %v990
        %v992 = vrot.slane %v336, %v991
        %vm993 = vcmp.eq.s32.totalorder %v958, %v964
        %vm994 = vcmp.eq.s32.totalorder %v958, %v968
        %vm995 = vcmp.eq.s32.totalorder %v958, %v972
        %vm996 = vcmp.eq.s32.totalorder %v958, %v976
        %vm997 = vcmp.eq.s32.totalorder %v958, %v980
        %vm998 = vcmp.eq.s32.totalorder %v958, %v984
        %vm999 = vcmp.eq.s32.totalorder %v958, %v988
        %vm1000 = vcmp.eq.s32.totalorder %v958, %v992
        %vm1001 = vcmp.eq.s32.totalorder %v959, %v964
        %vm1002 = vcmp.eq.s32.totalorder %v959, %v968
        %vm1003 = vcmp.eq.s32.totalorder %v959, %v972
        %vm1004 = vcmp.eq.s32.totalorder %v959, %v976
        %vm1005 = vcmp.eq.s32.totalorder %v959, %v980
        %vm1006 = vcmp.eq.s32.totalorder %v959, %v984
        %vm1007 = vcmp.eq.s32.totalorder %v959, %v988
        %vm1008 = vcmp.eq.s32.totalorder %v959, %v992
        %vm1009 = vcmp.eq.s32.totalorder %v960, %v964
        %vm1010 = vcmp.eq.s32.totalorder %v960, %v968
        %vm1011 = vcmp.eq.s32.totalorder %v960, %v972
        %vm1012 = vcmp.eq.s32.totalorder %v960, %v976
        %vm1013 = vcmp.eq.s32.totalorder %v960, %v980
        %vm1014 = vcmp.eq.s32.totalorder %v960, %v984
        %vm1015 = vcmp.eq.s32.totalorder %v960, %v988
        %vm1016 = vcmp.eq.s32.totalorder %v960, %v992
        %v1017 = vsel %vm993, %v797, 0.0
        %v1018 = vsel %vm994, %v798, 0.0
        %v1019 = vsel %vm995, %v799, 0.0
        %v1020 = vsel %vm996, %v800, 0.0
        %v1021 = vsel %vm997, %v801, 0.0
        %v1022 = vsel %vm998, %v802, 0.0
        %v1023 = vsel %vm999, %v803, 0.0
        %v1024 = vsel %vm1000, %v804, 0.0
        %v1025 = vsel %vm1001, %v805, 0.0
        %v1026 = vsel %vm1002, %v806, 0.0
        %v1027 = vsel %vm1003, %v807, 0.0
        %v1028 = vsel %vm1004, %v808, 0.0
        %v1029 = vsel %vm1005, %v809, 0.0
        %v1030 = vsel %vm1006, %v810, 0.0
        %v1031 = vsel %vm1007, %v811, 0.0
        %v1032 = vsel %vm1008, %v812, 0.0
        %v1033 = vsel %vm1009, %v813, 0.0
        %v1034 = vsel %vm1010, %v814, 0.0
        %v1035 = vsel %vm1011, %v815, 0.0
        %v1036 = vsel %vm1012, %v816, 0.0
        %v1037 = vsel %vm1013, %v817, 0.0
        %v1038 = vsel %vm1014, %v818, 0.0
        %v1039 = vsel %vm1015, %v819, 0.0
        %v1040 = vsel %vm1016, %v820, 0.0
        %v1041 = vadd.f32 %v1017, %v1025
        %v1042 = vsel %vm725, %v1033, 0.0
        %v1043 = vadd.f32 %v1041, %v1042
        %v1044 = vrot.slane %v1043, 4
        %v1045 = vadd.f32 %v1043, %v1044
        %v1046 = vrot.slane %v1045, 2
        %v1047 = vadd.f32 %v1045, %v1046
        %v1048 = vrot.slane %v1047, 1
        %v1049 = vadd.f32 %v1047, %v1048
        %v1050 = vadd.f32 %v1018, %v1026
        %v1051 = vsel %vm725, %v1034, 0.0
        %v1052 = vadd.f32 %v1050, %v1051
        %v1053 = vrot.slane %v1052, 4
        %v1054 = vadd.f32 %v1052, %v1053
        %v1055 = vrot.slane %v1054, 2
        %v1056 = vadd.f32 %v1054, %v1055
        %v1057 = vrot.slane %v1056, 1
        %v1058 = vadd.f32 %v1056, %v1057
        %v1059 = vadd.f32 %v1019, %v1027
        %v1060 = vsel %vm725, %v1035, 0.0
        %v1061 = vadd.f32 %v1059, %v1060
        %v1062 = vrot.slane %v1061, 4
        %v1063 = vadd.f32 %v1061, %v1062
        %v1064 = vrot.slane %v1063, 2
        %v1065 = vadd.f32 %v1063, %v1064
        %v1066 = vrot.slane %v1065, 1
        %v1067 = vadd.f32 %v1065, %v1066
        %v1068 = vadd.f32 %v1020, %v1028
        %v1069 = vsel %vm725, %v1036, 0.0
        %v1070 = vadd.f32 %v1068, %v1069
        %v1071 = vrot.slane %v1070, 4
        %v1072 = vadd.f32 %v1070, %v1071
        %v1073 = vrot.slane %v1072, 2
        %v1074 = vadd.f32 %v1072, %v1073
        %v1075 = vrot.slane %v1074, 1
        %v1076 = vadd.f32 %v1074, %v1075
        %v1077 = vadd.f32 %v1021, %v1029
        %v1078 = vsel %vm725, %v1037, 0.0
        %v1079 = vadd.f32 %v1077, %v1078
        %v1080 = vrot.slane %v1079, 4
        %v1081 = vadd.f32 %v1079, %v1080
        %v1082 = vrot.slane %v1081, 2
        %v1083 = vadd.f32 %v1081, %v1082
        %v1084 = vrot.slane %v1083, 1
        %v1085 = vadd.f32 %v1083, %v1084
        %v1086 = vadd.f32 %v1022, %v1030
        %v1087 = vsel %vm725, %v1038, 0.0
        %v1088 = vadd.f32 %v1086, %v1087
        %v1089 = vrot.slane %v1088, 4
        %v1090 = vadd.f32 %v1088, %v1089
        %v1091 = vrot.slane %v1090, 2
        %v1092 = vadd.f32 %v1090, %v1091
        %v1093 = vrot.slane %v1092, 1
        %v1094 = vadd.f32 %v1092, %v1093
        %v1095 = vadd.f32 %v1023, %v1031
        %v1096 = vsel %vm725, %v1039, 0.0
        %v1097 = vadd.f32 %v1095, %v1096
        %v1098 = vrot.slane %v1097, 4
        %v1099 = vadd.f32 %v1097, %v1098
        %v1100 = vrot.slane %v1099, 2
        %v1101 = vadd.f32 %v1099, %v1100
        %v1102 = vrot.slane %v1101, 1
        %v1103 = vadd.f32 %v1101, %v1102
        %v1104 = vadd.f32 %v1024, %v1032
        %v1105 = vsel %vm725, %v1040, 0.0
        %v1106 = vadd.f32 %v1104, %v1105
        %v1107 = vrot.slane %v1106, 4
        %v1108 = vadd.f32 %v1106, %v1107
        %v1109 = vrot.slane %v1108, 2
        %v1110 = vadd.f32 %v1108, %v1109
        %v1111 = vrot.slane %v1110, 1
        %v1112 = vadd.f32 %v1110, %v1111
        %v1113 = vsub.f32 %v942, %v1049
        %v1114 = vsub.f32 %v944, %v1058
        %v1115 = vsub.f32 %v946, %v1067
        %v1116 = vsub.f32 %v948, %v1076
        %v1117 = vsub.f32 %v950, %v1085
        %v1118 = vsub.f32 %v952, %v1094
        %v1119 = vsub.f32 %v954, %v1103
        %v1120 = vsub.f32 %v956, %v1112
        %v1121 = vld [vmem:[#allocation3] sm:$0x1]
        %v1123 = vlaneseq
        %v1124 = vshrl.u32 %v1123, 7
        %v1125 = vsub.s32 0, %v1124
        %v1126 = vrot.slane %v339, %v1125
        %v1127 = vlaneseq
        %v1128 = vshrl.u32 %v1127, 7
        %v1129 = vsub.s32 1, %v1128
        %v1130 = vrot.slane %v339, %v1129
        %v1131 = vlaneseq
        %v1132 = vshrl.u32 %v1131, 7
        %v1133 = vsub.s32 2, %v1132
        %v1134 = vrot.slane %v339, %v1133
        %v1135 = vlaneseq
        %v1136 = vshrl.u32 %v1135, 7
        %v1137 = vsub.s32 3, %v1136
        %v1138 = vrot.slane %v339, %v1137
        %v1139 = vlaneseq
        %v1140 = vshrl.u32 %v1139, 7
        %v1141 = vsub.s32 4, %v1140
        %v1142 = vrot.slane %v339, %v1141
        %v1143 = vlaneseq
        %v1144 = vshrl.u32 %v1143, 7
        %v1145 = vsub.s32 5, %v1144
        %v1146 = vrot.slane %v339, %v1145
        %v1147 = vlaneseq
        %v1148 = vshrl.u32 %v1147, 7
        %v1149 = vsub.s32 6, %v1148
        %v1150 = vrot.slane %v339, %v1149
        %v1151 = vlaneseq
        %v1152 = vshrl.u32 %v1151, 7
        %v1153 = vsub.s32 7, %v1152
        %v1154 = vrot.slane %v339, %v1153
        %vm1163 = vcmask 1040384
        %v1164 = vsel %vm1163, %v1126, 0.0
        %v1165 = vsel %vm1163, %v1130, 0.0
        %v1166 = vadd.f32 %v1164, %v1165
        %v1167 = vsel %vm1163, %v1134, 0.0
        %v1168 = vadd.f32 %v1166, %v1167
        %v1169 = vsel %vm1163, %v1138, 0.0
        %v1170 = vadd.f32 %v1168, %v1169
        %v1171 = vsel %vm1163, %v1142, 0.0
        %v1172 = vadd.f32 %v1170, %v1171
        %v1173 = vsel %vm1163, %v1146, 0.0
        %v1174 = vadd.f32 %v1172, %v1173
        %v1175 = vsel %vm1163, %v1150, 0.0
        %v1176 = vadd.f32 %v1174, %v1175
        %v1177 = vsel %vm1163, %v1154, 0.0
        %v1178 = vadd.f32 %v1176, %v1177
        %1179 = vadd.xlane.f32.xlu0 %v1178
        %v1180 = vpop.xlane.xlu0 %1179
        %v1181 = vrot.slane %v1180, 4
        %v1182 = vadd.f32 %v1180, %v1181
        %v1183 = vrot.slane %v1182, 2
        %v1184 = vadd.f32 %v1182, %v1183
        %v1185 = vrot.slane %v1184, 1
        %v1186 = vadd.f32 %v1184, %v1185
        %s1187 = vtos %v1186
        %v1188 = vstv %s1187
        %v1189 = vadd.f32 %v1121, %v1188
        %vm1190 = vcmask 0
        %1191 = vst.msk [vmem:[#allocation3] sm:$0x1] %vm1190, %v1189
        %v1192 = vld [vmem:[#allocation5] sm:$0x1]
        %v1201 = vcombine.low %v1113, %v1114
        %v1202 = vcombine.low %v1115, %v1116
        %v1203 = vcombine.low %v1117, %v1118
        %v1204 = vcombine.low %v1119, %v1120
        %v1206 = vunpack.c.l.s4 1966171168
        %v1207 = vunpack.c.0.s8 %v1206
        %v1208 = vlaneseq
        %v1209 = vshrl.u32 %v1208, 7
        %v1210 = vsub.s32 %v1207, %v1209
        %v1211 = vrot.slane %v1201, %v1210
        %v1213 = vunpack.c.l.s4 1966171168
        %v1214 = vunpack.c.0.s8 %v1213
        %v1215 = vlaneseq
        %v1216 = vshrl.u32 %v1215, 7
        %v1217 = vsub.s32 %v1214, %v1216
        %v1218 = vrot.slane %v1202, %v1217
        %v1220 = vunpack.c.l.s4 1966171168
        %v1221 = vunpack.c.0.s8 %v1220
        %v1222 = vlaneseq
        %v1223 = vshrl.u32 %v1222, 7
        %v1224 = vsub.s32 %v1221, %v1223
        %v1225 = vrot.slane %v1203, %v1224
        %v1227 = vunpack.c.l.s4 1966171168
        %v1228 = vunpack.c.0.s8 %v1227
        %v1229 = vlaneseq
        %v1230 = vshrl.u32 %v1229, 7
        %v1231 = vsub.s32 %v1228, %v1230
        %v1232 = vrot.slane %v1204, %v1231
        %v1233 = vcombine.low %v1211, %v1218
        %v1234 = vcombine.low %v1225, %v1232
        %v1236 = vunpack.c.l.s4 1966171168
        %v1237 = vunpack.c.0.s8 %v1236
        %v1238 = vlaneseq
        %v1239 = vshrl.u32 %v1238, 7
        %v1240 = vsub.s32 %v1237, %v1239
        %v1241 = vrot.slane %v1233, %v1240
        %v1243 = vunpack.c.l.s4 1966171168
        %v1244 = vunpack.c.0.s8 %v1243
        %v1245 = vlaneseq
        %v1246 = vshrl.u32 %v1245, 7
        %v1247 = vsub.s32 %v1244, %v1246
        %v1248 = vrot.slane %v1234, %v1247
        %v1249 = vcombine.low %v1241, %v1248
        %v1251 = vmul.f32 %v339, %v1249
        %v1253 = vlaneseq
        %v1254 = vshrl.u32 %v1253, 7
        %v1255 = vsub.s32 0, %v1254
        %v1256 = vrot.slane %v1251, %v1255
        %v1257 = vlaneseq
        %v1258 = vshrl.u32 %v1257, 7
        %v1259 = vsub.s32 1, %v1258
        %v1260 = vrot.slane %v1251, %v1259
        %v1261 = vlaneseq
        %v1262 = vshrl.u32 %v1261, 7
        %v1263 = vsub.s32 2, %v1262
        %v1264 = vrot.slane %v1251, %v1263
        %v1265 = vlaneseq
        %v1266 = vshrl.u32 %v1265, 7
        %v1267 = vsub.s32 3, %v1266
        %v1268 = vrot.slane %v1251, %v1267
        %v1269 = vlaneseq
        %v1270 = vshrl.u32 %v1269, 7
        %v1271 = vsub.s32 4, %v1270
        %v1272 = vrot.slane %v1251, %v1271
        %v1273 = vlaneseq
        %v1274 = vshrl.u32 %v1273, 7
        %v1275 = vsub.s32 5, %v1274
        %v1276 = vrot.slane %v1251, %v1275
        %v1277 = vlaneseq
        %v1278 = vshrl.u32 %v1277, 7
        %v1279 = vsub.s32 6, %v1278
        %v1280 = vrot.slane %v1251, %v1279
        %v1281 = vlaneseq
        %v1282 = vshrl.u32 %v1281, 7
        %v1283 = vsub.s32 7, %v1282
        %v1284 = vrot.slane %v1251, %v1283
        %v1293 = vsel %vm1163, %v1256, 0.0
        %v1294 = vsel %vm1163, %v1260, 0.0
        %v1295 = vadd.f32 %v1293, %v1294
        %v1296 = vsel %vm1163, %v1264, 0.0
        %v1297 = vadd.f32 %v1295, %v1296
        %v1298 = vsel %vm1163, %v1268, 0.0
        %v1299 = vadd.f32 %v1297, %v1298
        %v1300 = vsel %vm1163, %v1272, 0.0
        %v1301 = vadd.f32 %v1299, %v1300
        %v1302 = vsel %vm1163, %v1276, 0.0
        %v1303 = vadd.f32 %v1301, %v1302
        %v1304 = vsel %vm1163, %v1280, 0.0
        %v1305 = vadd.f32 %v1303, %v1304
        %v1306 = vsel %vm1163, %v1284, 0.0
        %v1307 = vadd.f32 %v1305, %v1306
        %1308 = vadd.xlane.f32.xlu0 %v1307
        %v1309 = vpop.xlane.xlu0 %1308
        %v1310 = vrot.slane %v1309, 4
        %v1311 = vadd.f32 %v1309, %v1310
        %v1312 = vrot.slane %v1311, 2
        %v1313 = vadd.f32 %v1311, %v1312
        %v1314 = vrot.slane %v1313, 1
        %v1315 = vadd.f32 %v1313, %v1314
        %s1316 = vtos %v1315
        %v1317 = vstv %s1316
        %v1318 = vadd.f32 %v1192, %v1317
        %1319 = vst.msk [vmem:[#allocation5] sm:$0x1] %vm1190, %v1318
        %v1320 = vsel %vm337, 0.0, %v1249
        %s1321 = smul.u32 %s23, 8
        %s1322 = scalar_lea.vmem [#allocation2], %s1321
        %1323 = vst [vmem:[%s1322] sm:$0xff] %v1320
        %v1324 = vld [vmem:[%s297] sm:$0xff]
        %v1325 = vld [vmem:[%s297 + $0x8] sm:$0xff]
        %v1326 = vld [vmem:[%s297 + $0x10] sm:$0xff]
        %v1327 = vld [vmem:[%s297 + $0x18] sm:$0xff]
        %v1328 = vld [vmem:[%s297 + $0x20] sm:$0xff]
        %v1329 = vld [vmem:[%s297 + $0x28] sm:$0xff]
        %v1330 = vld [vmem:[%s297 + $0x30] sm:$0xff]
        %v1331 = vld [vmem:[%s297 + $0x38] sm:$0xff]
        %v1332 = vld [vmem:[%s297 + $0x40] sm:$0xff]
        %v1333 = vld [vmem:[%s297 + $0x48] sm:$0xff]
        %v1334 = vld [vmem:[%s297 + $0x50] sm:$0xff]
        %v1335 = vld [vmem:[%s297 + $0x58] sm:$0xff]
        %v1336 = vld [vmem:[%s297 + $0x60] sm:$0xff]
        %v1337 = vld [vmem:[%s297 + $0x68] sm:$0xff]
        %v1338 = vld [vmem:[%s297 + $0x70] sm:$0xff]
        %v1339 = vld [vmem:[%s297 + $0x78] sm:$0xff]
        %v1340 = vld [vmem:[%s297 + $0x80] sm:$0xff]
        %v1341 = vld [vmem:[%s297 + $0x88] sm:$0xff]
        %v1342 = vld [vmem:[%s297 + $0x90] sm:$0xff]
        %v1343 = vld [vmem:[%s297 + $0x98] sm:$0xff]
        %v1344 = vld [vmem:[%s297 + $0xa0] sm:$0xff]
        %v1345 = vld [vmem:[%s297 + $0xa8] sm:$0xff]
        %v1346 = vld [vmem:[%s297 + $0xb0] sm:$0xff]
        %v1347 = vld [vmem:[%s297 + $0xb8] sm:$0xff]
        %v1348 = vld [vmem:[%s297 + $0xc0] sm:$0xff]
        %v1349 = vld [vmem:[%s297 + $0xc8] sm:$0xff]
        %v1350 = vld [vmem:[%s297 + $0xd0] sm:$0xff]
        %v1351 = vld [vmem:[%s297 + $0xd8] sm:$0xff]
        %v1352 = vld [vmem:[%s297 + $0xe0] sm:$0xff]
        %v1353 = vld [vmem:[%s297 + $0xe8] sm:$0xff]
        %v1354 = vld [vmem:[%s297 + $0xf0] sm:$0xff]
        %v1355 = vld [vmem:[%s297 + $0xf8] sm:$0xff]
        %v1356 = vld [vmem:[%s297 + $0x100] sm:$0xff]
        %v1357 = vld [vmem:[%s297 + $0x108] sm:$0xff]
        %v1358 = vld [vmem:[%s297 + $0x110] sm:$0xff]
        %v1359 = vld [vmem:[%s297 + $0x118] sm:$0xff]
        %v1360 = vld [vmem:[%s297 + $0x120] sm:$0xff]
        %v1361 = vld [vmem:[%s297 + $0x128] sm:$0xff]
        %v1362 = vld [vmem:[%s297 + $0x130] sm:$0xff]
        %v1363 = vld [vmem:[%s297 + $0x138] sm:$0xff]
        %v1364 = vld [vmem:[%s297 + $0x140] sm:$0xff]
        %v1365 = vld [vmem:[%s297 + $0x148] sm:$0xff]
        %v1366 = vld [vmem:[%s297 + $0x150] sm:$0xff]
        %v1367 = vld [vmem:[%s297 + $0x158] sm:$0xff]
        %v1368 = vld [vmem:[%s297 + $0x160] sm:$0xff]
        %v1369 = vld [vmem:[%s297 + $0x168] sm:$0xff]
        %v1370 = vld [vmem:[%s297 + $0x170] sm:$0xff]
        %v1371 = vld [vmem:[%s297 + $0x178] sm:$0xff]
        %v1372 = vld [vmem:[%s297 + $0x180] sm:$0xff]
        %v1373 = vld [vmem:[%s297 + $0x188] sm:$0xff]
        %v1374 = vld [vmem:[%s297 + $0x190] sm:$0xff]
        %v1375 = vld [vmem:[%s297 + $0x198] sm:$0xff]
        %v1376 = vld [vmem:[%s297 + $0x1a0] sm:$0xff]
        %v1377 = vld [vmem:[%s297 + $0x1a8] sm:$0xff]
        %v1378 = vld [vmem:[%s297 + $0x1b0] sm:$0xff]
        %v1379 = vld [vmem:[%s297 + $0x1b8] sm:$0xff]
        %v1380 = vld [vmem:[%s297 + $0x1c0] sm:$0xff]
        %v1381 = vld [vmem:[%s297 + $0x1c8] sm:$0xff]
        %v1382 = vld [vmem:[%s297 + $0x1d0] sm:$0xff]
        %v1383 = vld [vmem:[%s297 + $0x1d8] sm:$0xff]
        %v1384 = vld [vmem:[%s297 + $0x1e0] sm:$0xff]
        %v1385 = vld [vmem:[%s297 + $0x1e8] sm:$0xff]
        %v1386 = vld [vmem:[%s297 + $0x1f0] sm:$0xff]
        %v1387 = vld [vmem:[%s297 + $0x1f8] sm:$0xff]
        %v1388 = vld [vmem:[%s297 + $0x200] sm:$0xff]
        %v1389 = vld [vmem:[%s297 + $0x208] sm:$0xff]
        %v1390 = vld [vmem:[%s297 + $0x210] sm:$0xff]
        %v1391 = vld [vmem:[%s297 + $0x218] sm:$0xff]
        %v1392 = vld [vmem:[%s297 + $0x220] sm:$0xff]
        %v1393 = vld [vmem:[%s297 + $0x228] sm:$0xff]
        %v1394 = vld [vmem:[%s297 + $0x230] sm:$0xff]
        %v1395 = vld [vmem:[%s297 + $0x238] sm:$0xff]
        %v1396 = vld [vmem:[%s297 + $0x240] sm:$0xff]
        %v1397 = vld [vmem:[%s297 + $0x248] sm:$0xff]
        %v1398 = vld [vmem:[%s297 + $0x250] sm:$0xff]
        %v1399 = vld [vmem:[%s297 + $0x258] sm:$0xff]
        %v1400 = vld [vmem:[%s297 + $0x260] sm:$0xff]
        %v1401 = vld [vmem:[%s297 + $0x268] sm:$0xff]
        %v1402 = vld [vmem:[%s297 + $0x270] sm:$0xff]
        %v1403 = vld [vmem:[%s297 + $0x278] sm:$0xff]
        %v1404 = vld [vmem:[%s297 + $0x280] sm:$0xff]
        %v1405 = vld [vmem:[%s297 + $0x288] sm:$0xff]
        %v1406 = vld [vmem:[%s297 + $0x290] sm:$0xff]
        %v1407 = vld [vmem:[%s297 + $0x298] sm:$0xff]
        %v1408 = vld [vmem:[%s297 + $0x2a0] sm:$0xff]
        %v1409 = vld [vmem:[%s297 + $0x2a8] sm:$0xff]
        %v1410 = vld [vmem:[%s297 + $0x2b0] sm:$0xff]
        %v1411 = vld [vmem:[%s297 + $0x2b8] sm:$0xff]
        %v1412 = vld [vmem:[%s297 + $0x2c0] sm:$0xff]
        %v1413 = vld [vmem:[%s297 + $0x2c8] sm:$0xff]
        %v1414 = vld [vmem:[%s297 + $0x2d0] sm:$0xff]
        %v1415 = vld [vmem:[%s297 + $0x2d8] sm:$0xff]
        %v1416 = vld [vmem:[%s297 + $0x2e0] sm:$0xff]
        %v1417 = vld [vmem:[%s297 + $0x2e8] sm:$0xff]
        %v1418 = vld [vmem:[%s297 + $0x2f0] sm:$0xff]
        %v1419 = vld [vmem:[%s297 + $0x2f8] sm:$0xff]
        %v1420 = vld [vmem:[%s297 + $0x300] sm:$0xff]
        %v1421 = vld [vmem:[%s297 + $0x308] sm:$0xff]
        %v1422 = vld [vmem:[%s297 + $0x310] sm:$0xff]
        %v1423 = vld [vmem:[%s297 + $0x318] sm:$0xff]
        %v1424 = vld [vmem:[%s297 + $0x320] sm:$0xff]
        %v1425 = vld [vmem:[%s297 + $0x328] sm:$0xff]
        %v1426 = vld [vmem:[%s297 + $0x330] sm:$0xff]
        %v1427 = vld [vmem:[%s297 + $0x338] sm:$0xff]
        %v1428 = vld [vmem:[%s297 + $0x340] sm:$0xff]
        %v1429 = vld [vmem:[%s297 + $0x348] sm:$0xff]
        %v1430 = vld [vmem:[%s297 + $0x350] sm:$0xff]
        %v1431 = vld [vmem:[%s297 + $0x358] sm:$0xff]
        %v1432 = vld [vmem:[%s297 + $0x360] sm:$0xff]
        %v1433 = vld [vmem:[%s297 + $0x368] sm:$0xff]
        %v1434 = vld [vmem:[%s297 + $0x370] sm:$0xff]
        %v1435 = vld [vmem:[%s297 + $0x378] sm:$0xff]
        %v1436 = vld [vmem:[%s297 + $0x380] sm:$0xff]
        %v1437 = vld [vmem:[%s297 + $0x388] sm:$0xff]
        %v1438 = vld [vmem:[%s297 + $0x390] sm:$0xff]
        %v1439 = vld [vmem:[%s297 + $0x398] sm:$0xff]
        %v1440 = vld [vmem:[%s297 + $0x3a0] sm:$0xff]
        %v1441 = vld [vmem:[%s297 + $0x3a8] sm:$0xff]
        %v1442 = vld [vmem:[%s297 + $0x3b0] sm:$0xff]
        %v1443 = vld [vmem:[%s297 + $0x3b8] sm:$0xff]
        %v1444 = vld [vmem:[%s297 + $0x3c0] sm:$0xff]
        %v1445 = vld [vmem:[%s297 + $0x3c8] sm:$0xff]
        %v1446 = vld [vmem:[%s297 + $0x3d0] sm:$0xff]
        %v1447 = vld [vmem:[%s297 + $0x3d8] sm:$0xff]
        %v1448 = vld [vmem:[%s297 + $0x3e0] sm:$0xff]
        %v1449 = vld [vmem:[%s297 + $0x3e8] sm:$0xff]
        %v1450 = vld [vmem:[%s297 + $0x3f0] sm:$0xff]
        %v1451 = vld [vmem:[%s297 + $0x3f8] sm:$0xff]
        %v1452 = vld [vmem:[%s307] sm:$0xff]
        %v1453 = vld [vmem:[%s307 + $0x8] sm:$0xff]
        %v1454 = vld [vmem:[%s307 + $0x10] sm:$0xff]
        %v1455 = vld [vmem:[%s307 + $0x18] sm:$0xff]
        %v1456 = vld [vmem:[%s307 + $0x20] sm:$0xff]
        %v1457 = vld [vmem:[%s307 + $0x28] sm:$0xff]
        %v1458 = vld [vmem:[%s307 + $0x30] sm:$0xff]
        %v1459 = vld [vmem:[%s307 + $0x38] sm:$0xff]
        %v1460 = vld [vmem:[%s307 + $0x40] sm:$0xff]
        %v1461 = vld [vmem:[%s307 + $0x48] sm:$0xff]
        %v1462 = vld [vmem:[%s307 + $0x50] sm:$0xff]
        %v1463 = vld [vmem:[%s307 + $0x58] sm:$0xff]
        %v1464 = vld [vmem:[%s307 + $0x60] sm:$0xff]
        %v1465 = vld [vmem:[%s307 + $0x68] sm:$0xff]
        %v1466 = vld [vmem:[%s307 + $0x70] sm:$0xff]
        %v1467 = vld [vmem:[%s307 + $0x78] sm:$0xff]
        %v1468 = vld [vmem:[%s307 + $0x80] sm:$0xff]
        %v1469 = vld [vmem:[%s307 + $0x88] sm:$0xff]
        %v1470 = vld [vmem:[%s307 + $0x90] sm:$0xff]
        %v1471 = vld [vmem:[%s307 + $0x98] sm:$0xff]
        %v1472 = vld [vmem:[%s307 + $0xa0] sm:$0xff]
        %v1473 = vld [vmem:[%s307 + $0xa8] sm:$0xff]
        %v1474 = vld [vmem:[%s307 + $0xb0] sm:$0xff]
        %v1475 = vld [vmem:[%s307 + $0xb8] sm:$0xff]
        %v1476 = vld [vmem:[%s307 + $0xc0] sm:$0xff]
        %v1477 = vld [vmem:[%s307 + $0xc8] sm:$0xff]
        %v1478 = vld [vmem:[%s307 + $0xd0] sm:$0xff]
        %v1479 = vld [vmem:[%s307 + $0xd8] sm:$0xff]
        %v1480 = vld [vmem:[%s307 + $0xe0] sm:$0xff]
        %v1481 = vld [vmem:[%s307 + $0xe8] sm:$0xff]
        %v1482 = vld [vmem:[%s307 + $0xf0] sm:$0xff]
        %v1483 = vld [vmem:[%s307 + $0xf8] sm:$0xff]
        %v1484 = vld [vmem:[%s307 + $0x100] sm:$0xff]
        %v1485 = vld [vmem:[%s307 + $0x108] sm:$0xff]
        %v1486 = vld [vmem:[%s307 + $0x110] sm:$0xff]
        %v1487 = vld [vmem:[%s307 + $0x118] sm:$0xff]
        %v1488 = vld [vmem:[%s307 + $0x120] sm:$0xff]
        %v1489 = vld [vmem:[%s307 + $0x128] sm:$0xff]
        %v1490 = vld [vmem:[%s307 + $0x130] sm:$0xff]
        %v1491 = vld [vmem:[%s307 + $0x138] sm:$0xff]
        %v1492 = vld [vmem:[%s307 + $0x140] sm:$0xff]
        %v1493 = vld [vmem:[%s307 + $0x148] sm:$0xff]
        %v1494 = vld [vmem:[%s307 + $0x150] sm:$0xff]
        %v1495 = vld [vmem:[%s307 + $0x158] sm:$0xff]
        %v1496 = vld [vmem:[%s307 + $0x160] sm:$0xff]
        %v1497 = vld [vmem:[%s307 + $0x168] sm:$0xff]
        %v1498 = vld [vmem:[%s307 + $0x170] sm:$0xff]
        %v1499 = vld [vmem:[%s307 + $0x178] sm:$0xff]
        %v1500 = vld [vmem:[%s307 + $0x180] sm:$0xff]
        %v1501 = vld [vmem:[%s307 + $0x188] sm:$0xff]
        %v1502 = vld [vmem:[%s307 + $0x190] sm:$0xff]
        %v1503 = vld [vmem:[%s307 + $0x198] sm:$0xff]
        %v1504 = vld [vmem:[%s307 + $0x1a0] sm:$0xff]
        %v1505 = vld [vmem:[%s307 + $0x1a8] sm:$0xff]
        %v1506 = vld [vmem:[%s307 + $0x1b0] sm:$0xff]
        %v1507 = vld [vmem:[%s307 + $0x1b8] sm:$0xff]
        %v1508 = vld [vmem:[%s307 + $0x1c0] sm:$0xff]
        %v1509 = vld [vmem:[%s307 + $0x1c8] sm:$0xff]
        %v1510 = vld [vmem:[%s307 + $0x1d0] sm:$0xff]
        %v1511 = vld [vmem:[%s307 + $0x1d8] sm:$0xff]
        %v1512 = vld [vmem:[%s307 + $0x1e0] sm:$0xff]
        %v1513 = vld [vmem:[%s307 + $0x1e8] sm:$0xff]
        %v1514 = vld [vmem:[%s307 + $0x1f0] sm:$0xff]
        %v1515 = vld [vmem:[%s307 + $0x1f8] sm:$0xff]
        %v1516 = vld [vmem:[%s307 + $0x200] sm:$0xff]
        %v1517 = vld [vmem:[%s307 + $0x208] sm:$0xff]
        %v1518 = vld [vmem:[%s307 + $0x210] sm:$0xff]
        %v1519 = vld [vmem:[%s307 + $0x218] sm:$0xff]
        %v1520 = vld [vmem:[%s307 + $0x220] sm:$0xff]
        %v1521 = vld [vmem:[%s307 + $0x228] sm:$0xff]
        %v1522 = vld [vmem:[%s307 + $0x230] sm:$0xff]
        %v1523 = vld [vmem:[%s307 + $0x238] sm:$0xff]
        %v1524 = vld [vmem:[%s307 + $0x240] sm:$0xff]
        %v1525 = vld [vmem:[%s307 + $0x248] sm:$0xff]
        %v1526 = vld [vmem:[%s307 + $0x250] sm:$0xff]
        %v1527 = vld [vmem:[%s307 + $0x258] sm:$0xff]
        %v1528 = vld [vmem:[%s307 + $0x260] sm:$0xff]
        %v1529 = vld [vmem:[%s307 + $0x268] sm:$0xff]
        %v1530 = vld [vmem:[%s307 + $0x270] sm:$0xff]
        %v1531 = vld [vmem:[%s307 + $0x278] sm:$0xff]
        %v1532 = vld [vmem:[%s307 + $0x280] sm:$0xff]
        %v1533 = vld [vmem:[%s307 + $0x288] sm:$0xff]
        %v1534 = vld [vmem:[%s307 + $0x290] sm:$0xff]
        %v1535 = vld [vmem:[%s307 + $0x298] sm:$0xff]
        %v1536 = vld [vmem:[%s307 + $0x2a0] sm:$0xff]
        %v1537 = vld [vmem:[%s307 + $0x2a8] sm:$0xff]
        %v1538 = vld [vmem:[%s307 + $0x2b0] sm:$0xff]
        %v1539 = vld [vmem:[%s307 + $0x2b8] sm:$0xff]
        %v1540 = vld [vmem:[%s307 + $0x2c0] sm:$0xff]
        %v1541 = vld [vmem:[%s307 + $0x2c8] sm:$0xff]
        %v1542 = vld [vmem:[%s307 + $0x2d0] sm:$0xff]
        %v1543 = vld [vmem:[%s307 + $0x2d8] sm:$0xff]
        %v1544 = vld [vmem:[%s307 + $0x2e0] sm:$0xff]
        %v1545 = vld [vmem:[%s307 + $0x2e8] sm:$0xff]
        %v1546 = vld [vmem:[%s307 + $0x2f0] sm:$0xff]
        %v1547 = vld [vmem:[%s307 + $0x2f8] sm:$0xff]
        %v1548 = vld [vmem:[%s307 + $0x300] sm:$0xff]
        %v1549 = vld [vmem:[%s307 + $0x308] sm:$0xff]
        %v1550 = vld [vmem:[%s307 + $0x310] sm:$0xff]
        %v1551 = vld [vmem:[%s307 + $0x318] sm:$0xff]
        %v1552 = vld [vmem:[%s307 + $0x320] sm:$0xff]
        %v1553 = vld [vmem:[%s307 + $0x328] sm:$0xff]
        %v1554 = vld [vmem:[%s307 + $0x330] sm:$0xff]
        %v1555 = vld [vmem:[%s307 + $0x338] sm:$0xff]
        %v1556 = vld [vmem:[%s307 + $0x340] sm:$0xff]
        %v1557 = vld [vmem:[%s307 + $0x348] sm:$0xff]
        %v1558 = vld [vmem:[%s307 + $0x350] sm:$0xff]
        %v1559 = vld [vmem:[%s307 + $0x358] sm:$0xff]
        %v1560 = vld [vmem:[%s307 + $0x360] sm:$0xff]
        %v1561 = vld [vmem:[%s307 + $0x368] sm:$0xff]
        %v1562 = vld [vmem:[%s307 + $0x370] sm:$0xff]
        %v1563 = vld [vmem:[%s307 + $0x378] sm:$0xff]
        %v1564 = vld [vmem:[%s307 + $0x380] sm:$0xff]
        %v1565 = vld [vmem:[%s307 + $0x388] sm:$0xff]
        %v1566 = vld [vmem:[%s307 + $0x390] sm:$0xff]
        %v1567 = vld [vmem:[%s307 + $0x398] sm:$0xff]
        %v1568 = vld [vmem:[%s307 + $0x3a0] sm:$0xff]
        %v1569 = vld [vmem:[%s307 + $0x3a8] sm:$0xff]
        %v1570 = vld [vmem:[%s307 + $0x3b0] sm:$0xff]
        %v1571 = vld [vmem:[%s307 + $0x3b8] sm:$0xff]
        %v1572 = vld [vmem:[%s307 + $0x3c0] sm:$0xff]
        %v1573 = vld [vmem:[%s307 + $0x3c8] sm:$0xff]
        %v1574 = vld [vmem:[%s307 + $0x3d0] sm:$0xff]
        %v1575 = vld [vmem:[%s307 + $0x3d8] sm:$0xff]
        %v1576 = vld [vmem:[%s307 + $0x3e0] sm:$0xff]
        %v1577 = vld [vmem:[%s307 + $0x3e8] sm:$0xff]
        %v1578 = vld [vmem:[%s307 + $0x3f0] sm:$0xff]
        %v1579 = vld [vmem:[%s307 + $0x3f8] sm:$0xff]
        %v1580 = vsub.f32 %v1324, %v1452
        %v1581 = vsub.f32 %v1325, %v1453
        %v1582 = vsub.f32 %v1326, %v1454
        %v1583 = vsub.f32 %v1327, %v1455
        %v1584 = vsub.f32 %v1328, %v1456
        %v1585 = vsub.f32 %v1329, %v1457
        %v1586 = vsub.f32 %v1330, %v1458
        %v1587 = vsub.f32 %v1331, %v1459
        %v1588 = vsub.f32 %v1332, %v1460
        %v1589 = vsub.f32 %v1333, %v1461
        %v1590 = vsub.f32 %v1334, %v1462
        %v1591 = vsub.f32 %v1335, %v1463
        %v1592 = vsub.f32 %v1336, %v1464
        %v1593 = vsub.f32 %v1337, %v1465
        %v1594 = vsub.f32 %v1338, %v1466
        %v1595 = vsub.f32 %v1339, %v1467
        %v1596 = vsub.f32 %v1340, %v1468
        %v1597 = vsub.f32 %v1341, %v1469
        %v1598 = vsub.f32 %v1342, %v1470
        %v1599 = vsub.f32 %v1343, %v1471
        %v1600 = vsub.f32 %v1344, %v1472
        %v1601 = vsub.f32 %v1345, %v1473
        %v1602 = vsub.f32 %v1346, %v1474
        %v1603 = vsub.f32 %v1347, %v1475
        %v1604 = vsub.f32 %v1348, %v1476
        %v1605 = vsub.f32 %v1349, %v1477
        %v1606 = vsub.f32 %v1350, %v1478
        %v1607 = vsub.f32 %v1351, %v1479
        %v1608 = vsub.f32 %v1352, %v1480
        %v1609 = vsub.f32 %v1353, %v1481
        %v1610 = vsub.f32 %v1354, %v1482
        %v1611 = vsub.f32 %v1355, %v1483
        %v1612 = vsub.f32 %v1356, %v1484
        %v1613 = vsub.f32 %v1357, %v1485
        %v1614 = vsub.f32 %v1358, %v1486
        %v1615 = vsub.f32 %v1359, %v1487
        %v1616 = vsub.f32 %v1360, %v1488
        %v1617 = vsub.f32 %v1361, %v1489
        %v1618 = vsub.f32 %v1362, %v1490
        %v1619 = vsub.f32 %v1363, %v1491
        %v1620 = vsub.f32 %v1364, %v1492
        %v1621 = vsub.f32 %v1365, %v1493
        %v1622 = vsub.f32 %v1366, %v1494
        %v1623 = vsub.f32 %v1367, %v1495
        %v1624 = vsub.f32 %v1368, %v1496
        %v1625 = vsub.f32 %v1369, %v1497
        %v1626 = vsub.f32 %v1370, %v1498
        %v1627 = vsub.f32 %v1371, %v1499
        %v1628 = vsub.f32 %v1372, %v1500
        %v1629 = vsub.f32 %v1373, %v1501
        %v1630 = vsub.f32 %v1374, %v1502
        %v1631 = vsub.f32 %v1375, %v1503
        %v1632 = vsub.f32 %v1376, %v1504
        %v1633 = vsub.f32 %v1377, %v1505
        %v1634 = vsub.f32 %v1378, %v1506
        %v1635 = vsub.f32 %v1379, %v1507
        %v1636 = vsub.f32 %v1380, %v1508
        %v1637 = vsub.f32 %v1381, %v1509
        %v1638 = vsub.f32 %v1382, %v1510
        %v1639 = vsub.f32 %v1383, %v1511
        %v1640 = vsub.f32 %v1384, %v1512
        %v1641 = vsub.f32 %v1385, %v1513
        %v1642 = vsub.f32 %v1386, %v1514
        %v1643 = vsub.f32 %v1387, %v1515
        %v1644 = vsub.f32 %v1388, %v1516
        %v1645 = vsub.f32 %v1389, %v1517
        %v1646 = vsub.f32 %v1390, %v1518
        %v1647 = vsub.f32 %v1391, %v1519
        %v1648 = vsub.f32 %v1392, %v1520
        %v1649 = vsub.f32 %v1393, %v1521
        %v1650 = vsub.f32 %v1394, %v1522
        %v1651 = vsub.f32 %v1395, %v1523
        %v1652 = vsub.f32 %v1396, %v1524
        %v1653 = vsub.f32 %v1397, %v1525
        %v1654 = vsub.f32 %v1398, %v1526
        %v1655 = vsub.f32 %v1399, %v1527
        %v1656 = vsub.f32 %v1400, %v1528
        %v1657 = vsub.f32 %v1401, %v1529
        %v1658 = vsub.f32 %v1402, %v1530
        %v1659 = vsub.f32 %v1403, %v1531
        %v1660 = vsub.f32 %v1404, %v1532
        %v1661 = vsub.f32 %v1405, %v1533
        %v1662 = vsub.f32 %v1406, %v1534
        %v1663 = vsub.f32 %v1407, %v1535
        %v1664 = vsub.f32 %v1408, %v1536
        %v1665 = vsub.f32 %v1409, %v1537
        %v1666 = vsub.f32 %v1410, %v1538
        %v1667 = vsub.f32 %v1411, %v1539
        %v1668 = vsub.f32 %v1412, %v1540
        %v1669 = vsub.f32 %v1413, %v1541
        %v1670 = vsub.f32 %v1414, %v1542
        %v1671 = vsub.f32 %v1415, %v1543
        %v1672 = vsub.f32 %v1416, %v1544
        %v1673 = vsub.f32 %v1417, %v1545
        %v1674 = vsub.f32 %v1418, %v1546
        %v1675 = vsub.f32 %v1419, %v1547
        %v1676 = vsub.f32 %v1420, %v1548
        %v1677 = vsub.f32 %v1421, %v1549
        %v1678 = vsub.f32 %v1422, %v1550
        %v1679 = vsub.f32 %v1423, %v1551
        %v1680 = vsub.f32 %v1424, %v1552
        %v1681 = vsub.f32 %v1425, %v1553
        %v1682 = vsub.f32 %v1426, %v1554
        %v1683 = vsub.f32 %v1427, %v1555
        %v1684 = vsub.f32 %v1428, %v1556
        %v1685 = vsub.f32 %v1429, %v1557
        %v1686 = vsub.f32 %v1430, %v1558
        %v1687 = vsub.f32 %v1431, %v1559
        %v1688 = vsub.f32 %v1432, %v1560
        %v1689 = vsub.f32 %v1433, %v1561
        %v1690 = vsub.f32 %v1434, %v1562
        %v1691 = vsub.f32 %v1435, %v1563
        %v1692 = vsub.f32 %v1436, %v1564
        %v1693 = vsub.f32 %v1437, %v1565
        %v1694 = vsub.f32 %v1438, %v1566
        %v1695 = vsub.f32 %v1439, %v1567
        %v1696 = vsub.f32 %v1440, %v1568
        %v1697 = vsub.f32 %v1441, %v1569
        %v1698 = vsub.f32 %v1442, %v1570
        %v1699 = vsub.f32 %v1443, %v1571
        %v1700 = vsub.f32 %v1444, %v1572
        %v1701 = vsub.f32 %v1445, %v1573
        %v1702 = vsub.f32 %v1446, %v1574
        %v1703 = vsub.f32 %v1447, %v1575
        %v1704 = vsub.f32 %v1448, %v1576
        %v1705 = vsub.f32 %v1449, %v1577
        %v1706 = vsub.f32 %v1450, %v1578
        %v1707 = vsub.f32 %v1451, %v1579
        %1708 = vxpose.xlu0.b32.start [1/16] %v1580, 128
        %1709 = vxpose.xlu0.b32.cont [2/16] %v1581, 128
        %1710 = vxpose.xlu0.b32.cont [3/16] %v1582, 128
        %1711 = vxpose.xlu0.b32.cont [4/16] %v1583, 128
        %1712 = vxpose.xlu0.b32.cont [5/16] %v1584, 128
        %1713 = vxpose.xlu0.b32.cont [6/16] %v1585, 128
        %1714 = vxpose.xlu0.b32.cont [7/16] %v1586, 128
        %1715 = vxpose.xlu0.b32.cont [8/16] %v1587, 128
        %1716 = vxpose.xlu0.b32.cont [9/16] %v1588, 128
        %1717 = vxpose.xlu0.b32.cont [10/16] %v1589, 128
        %1718 = vxpose.xlu0.b32.cont [11/16] %v1590, 128
        %1719 = vxpose.xlu0.b32.cont [12/16] %v1591, 128
        %1720 = vxpose.xlu0.b32.cont [13/16] %v1592, 128
        %1721 = vxpose.xlu0.b32.cont [14/16] %v1593, 128
        %1722 = vxpose.xlu0.b32.cont [15/16] %v1594, 128
        %1723 = vxpose.xlu0.b32.end [16/16] %v1595, 128
        %v1724 = vpop.trf.xlu0
        %v1725 = vpop.trf.xlu0
        %v1726 = vpop.trf.xlu0
        %v1727 = vpop.trf.xlu0
        %v1728 = vpop.trf.xlu0
        %v1729 = vpop.trf.xlu0
        %v1730 = vpop.trf.xlu0
        %v1731 = vpop.trf.xlu0
        %v1732 = vpop.trf.xlu0
        %v1733 = vpop.trf.xlu0
        %v1734 = vpop.trf.xlu0
        %v1735 = vpop.trf.xlu0
        %v1736 = vpop.trf.xlu0
        %v1737 = vpop.trf.xlu0
        %v1738 = vpop.trf.xlu0
        %v1739 = vpop.trf.xlu0
        %1740 = vxpose.xlu0.b32.start [1/16] %v1596, 128
        %1741 = vxpose.xlu0.b32.cont [2/16] %v1597, 128
        %1742 = vxpose.xlu0.b32.cont [3/16] %v1598, 128
        %1743 = vxpose.xlu0.b32.cont [4/16] %v1599, 128
        %1744 = vxpose.xlu0.b32.cont [5/16] %v1600, 128
        %1745 = vxpose.xlu0.b32.cont [6/16] %v1601, 128
        %1746 = vxpose.xlu0.b32.cont [7/16] %v1602, 128
        %1747 = vxpose.xlu0.b32.cont [8/16] %v1603, 128
        %1748 = vxpose.xlu0.b32.cont [9/16] %v1604, 128
        %1749 = vxpose.xlu0.b32.cont [10/16] %v1605, 128
        %1750 = vxpose.xlu0.b32.cont [11/16] %v1606, 128
        %1751 = vxpose.xlu0.b32.cont [12/16] %v1607, 128
        %1752 = vxpose.xlu0.b32.cont [13/16] %v1608, 128
        %1753 = vxpose.xlu0.b32.cont [14/16] %v1609, 128
        %1754 = vxpose.xlu0.b32.cont [15/16] %v1610, 128
        %1755 = vxpose.xlu0.b32.end [16/16] %v1611, 128
        %v1756 = vpop.trf.xlu0
        %v1757 = vpop.trf.xlu0
        %v1758 = vpop.trf.xlu0
        %v1759 = vpop.trf.xlu0
        %v1760 = vpop.trf.xlu0
        %v1761 = vpop.trf.xlu0
        %v1762 = vpop.trf.xlu0
        %v1763 = vpop.trf.xlu0
        %v1764 = vpop.trf.xlu0
        %v1765 = vpop.trf.xlu0
        %v1766 = vpop.trf.xlu0
        %v1767 = vpop.trf.xlu0
        %v1768 = vpop.trf.xlu0
        %v1769 = vpop.trf.xlu0
        %v1770 = vpop.trf.xlu0
        %v1771 = vpop.trf.xlu0
        %1772 = vxpose.xlu0.b32.start [1/16] %v1612, 128
        %1773 = vxpose.xlu0.b32.cont [2/16] %v1613, 128
        %1774 = vxpose.xlu0.b32.cont [3/16] %v1614, 128
        %1775 = vxpose.xlu0.b32.cont [4/16] %v1615, 128
        %1776 = vxpose.xlu0.b32.cont [5/16] %v1616, 128
        %1777 = vxpose.xlu0.b32.cont [6/16] %v1617, 128
        %1778 = vxpose.xlu0.b32.cont [7/16] %v1618, 128
        %1779 = vxpose.xlu0.b32.cont [8/16] %v1619, 128
        %1780 = vxpose.xlu0.b32.cont [9/16] %v1620, 128
        %1781 = vxpose.xlu0.b32.cont [10/16] %v1621, 128
        %1782 = vxpose.xlu0.b32.cont [11/16] %v1622, 128
        %1783 = vxpose.xlu0.b32.cont [12/16] %v1623, 128
        %1784 = vxpose.xlu0.b32.cont [13/16] %v1624, 128
        %1785 = vxpose.xlu0.b32.cont [14/16] %v1625, 128
        %1786 = vxpose.xlu0.b32.cont [15/16] %v1626, 128
        %1787 = vxpose.xlu0.b32.end [16/16] %v1627, 128
        %v1788 = vpop.trf.xlu0
        %v1789 = vpop.trf.xlu0
        %v1790 = vpop.trf.xlu0
        %v1791 = vpop.trf.xlu0
        %v1792 = vpop.trf.xlu0
        %v1793 = vpop.trf.xlu0
        %v1794 = vpop.trf.xlu0
        %v1795 = vpop.trf.xlu0
        %v1796 = vpop.trf.xlu0
        %v1797 = vpop.trf.xlu0
        %v1798 = vpop.trf.xlu0
        %v1799 = vpop.trf.xlu0
        %v1800 = vpop.trf.xlu0
        %v1801 = vpop.trf.xlu0
        %v1802 = vpop.trf.xlu0
        %v1803 = vpop.trf.xlu0
        %1804 = vxpose.xlu0.b32.start [1/16] %v1628, 128
        %1805 = vxpose.xlu0.b32.cont [2/16] %v1629, 128
        %1806 = vxpose.xlu0.b32.cont [3/16] %v1630, 128
        %1807 = vxpose.xlu0.b32.cont [4/16] %v1631, 128
        %1808 = vxpose.xlu0.b32.cont [5/16] %v1632, 128
        %1809 = vxpose.xlu0.b32.cont [6/16] %v1633, 128
        %1810 = vxpose.xlu0.b32.cont [7/16] %v1634, 128
        %1811 = vxpose.xlu0.b32.cont [8/16] %v1635, 128
        %1812 = vxpose.xlu0.b32.cont [9/16] %v1636, 128
        %1813 = vxpose.xlu0.b32.cont [10/16] %v1637, 128
        %1814 = vxpose.xlu0.b32.cont [11/16] %v1638, 128
        %1815 = vxpose.xlu0.b32.cont [12/16] %v1639, 128
        %1816 = vxpose.xlu0.b32.cont [13/16] %v1640, 128
        %1817 = vxpose.xlu0.b32.cont [14/16] %v1641, 128
        %1818 = vxpose.xlu0.b32.cont [15/16] %v1642, 128
        %1819 = vxpose.xlu0.b32.end [16/16] %v1643, 128
        %v1820 = vpop.trf.xlu0
        %v1821 = vpop.trf.xlu0
        %v1822 = vpop.trf.xlu0
        %v1823 = vpop.trf.xlu0
        %v1824 = vpop.trf.xlu0
        %v1825 = vpop.trf.xlu0
        %v1826 = vpop.trf.xlu0
        %v1827 = vpop.trf.xlu0
        %v1828 = vpop.trf.xlu0
        %v1829 = vpop.trf.xlu0
        %v1830 = vpop.trf.xlu0
        %v1831 = vpop.trf.xlu0
        %v1832 = vpop.trf.xlu0
        %v1833 = vpop.trf.xlu0
        %v1834 = vpop.trf.xlu0
        %v1835 = vpop.trf.xlu0
        %1836 = vxpose.xlu0.b32.start [1/16] %v1644, 128
        %1837 = vxpose.xlu0.b32.cont [2/16] %v1645, 128
        %1838 = vxpose.xlu0.b32.cont [3/16] %v1646, 128
        %1839 = vxpose.xlu0.b32.cont [4/16] %v1647, 128
        %1840 = vxpose.xlu0.b32.cont [5/16] %v1648, 128
        %1841 = vxpose.xlu0.b32.cont [6/16] %v1649, 128
        %1842 = vxpose.xlu0.b32.cont [7/16] %v1650, 128
        %1843 = vxpose.xlu0.b32.cont [8/16] %v1651, 128
        %1844 = vxpose.xlu0.b32.cont [9/16] %v1652, 128
        %1845 = vxpose.xlu0.b32.cont [10/16] %v1653, 128
        %1846 = vxpose.xlu0.b32.cont [11/16] %v1654, 128
        %1847 = vxpose.xlu0.b32.cont [12/16] %v1655, 128
        %1848 = vxpose.xlu0.b32.cont [13/16] %v1656, 128
        %1849 = vxpose.xlu0.b32.cont [14/16] %v1657, 128
        %1850 = vxpose.xlu0.b32.cont [15/16] %v1658, 128
        %1851 = vxpose.xlu0.b32.end [16/16] %v1659, 128
        %v1852 = vpop.trf.xlu0
        %v1853 = vpop.trf.xlu0
        %v1854 = vpop.trf.xlu0
        %v1855 = vpop.trf.xlu0
        %v1856 = vpop.trf.xlu0
        %v1857 = vpop.trf.xlu0
        %v1858 = vpop.trf.xlu0
        %v1859 = vpop.trf.xlu0
        %v1860 = vpop.trf.xlu0
        %v1861 = vpop.trf.xlu0
        %v1862 = vpop.trf.xlu0
        %v1863 = vpop.trf.xlu0
        %v1864 = vpop.trf.xlu0
        %v1865 = vpop.trf.xlu0
        %v1866 = vpop.trf.xlu0
        %v1867 = vpop.trf.xlu0
        %1868 = vxpose.xlu0.b32.start [1/16] %v1660, 128
        %1869 = vxpose.xlu0.b32.cont [2/16] %v1661, 128
        %1870 = vxpose.xlu0.b32.cont [3/16] %v1662, 128
        %1871 = vxpose.xlu0.b32.cont [4/16] %v1663, 128
        %1872 = vxpose.xlu0.b32.cont [5/16] %v1664, 128
        %1873 = vxpose.xlu0.b32.cont [6/16] %v1665, 128
        %1874 = vxpose.xlu0.b32.cont [7/16] %v1666, 128
        %1875 = vxpose.xlu0.b32.cont [8/16] %v1667, 128
        %1876 = vxpose.xlu0.b32.cont [9/16] %v1668, 128
        %1877 = vxpose.xlu0.b32.cont [10/16] %v1669, 128
        %1878 = vxpose.xlu0.b32.cont [11/16] %v1670, 128
        %1879 = vxpose.xlu0.b32.cont [12/16] %v1671, 128
        %1880 = vxpose.xlu0.b32.cont [13/16] %v1672, 128
        %1881 = vxpose.xlu0.b32.cont [14/16] %v1673, 128
        %1882 = vxpose.xlu0.b32.cont [15/16] %v1674, 128
        %1883 = vxpose.xlu0.b32.end [16/16] %v1675, 128
        %v1884 = vpop.trf.xlu0
        %v1885 = vpop.trf.xlu0
        %v1886 = vpop.trf.xlu0
        %v1887 = vpop.trf.xlu0
        %v1888 = vpop.trf.xlu0
        %v1889 = vpop.trf.xlu0
        %v1890 = vpop.trf.xlu0
        %v1891 = vpop.trf.xlu0
        %v1892 = vpop.trf.xlu0
        %v1893 = vpop.trf.xlu0
        %v1894 = vpop.trf.xlu0
        %v1895 = vpop.trf.xlu0
        %v1896 = vpop.trf.xlu0
        %v1897 = vpop.trf.xlu0
        %v1898 = vpop.trf.xlu0
        %v1899 = vpop.trf.xlu0
        %1900 = vxpose.xlu0.b32.start [1/16] %v1676, 128
        %1901 = vxpose.xlu0.b32.cont [2/16] %v1677, 128
        %1902 = vxpose.xlu0.b32.cont [3/16] %v1678, 128
        %1903 = vxpose.xlu0.b32.cont [4/16] %v1679, 128
        %1904 = vxpose.xlu0.b32.cont [5/16] %v1680, 128
        %1905 = vxpose.xlu0.b32.cont [6/16] %v1681, 128
        %1906 = vxpose.xlu0.b32.cont [7/16] %v1682, 128
        %1907 = vxpose.xlu0.b32.cont [8/16] %v1683, 128
        %1908 = vxpose.xlu0.b32.cont [9/16] %v1684, 128
        %1909 = vxpose.xlu0.b32.cont [10/16] %v1685, 128
        %1910 = vxpose.xlu0.b32.cont [11/16] %v1686, 128
        %1911 = vxpose.xlu0.b32.cont [12/16] %v1687, 128
        %1912 = vxpose.xlu0.b32.cont [13/16] %v1688, 128
        %1913 = vxpose.xlu0.b32.cont [14/16] %v1689, 128
        %1914 = vxpose.xlu0.b32.cont [15/16] %v1690, 128
        %1915 = vxpose.xlu0.b32.end [16/16] %v1691, 128
        %v1916 = vpop.trf.xlu0
        %v1917 = vpop.trf.xlu0
        %v1918 = vpop.trf.xlu0
        %v1919 = vpop.trf.xlu0
        %v1920 = vpop.trf.xlu0
        %v1921 = vpop.trf.xlu0
        %v1922 = vpop.trf.xlu0
        %v1923 = vpop.trf.xlu0
        %v1924 = vpop.trf.xlu0
        %v1925 = vpop.trf.xlu0
        %v1926 = vpop.trf.xlu0
        %v1927 = vpop.trf.xlu0
        %v1928 = vpop.trf.xlu0
        %v1929 = vpop.trf.xlu0
        %v1930 = vpop.trf.xlu0
        %v1931 = vpop.trf.xlu0
        %1932 = vxpose.xlu0.b32.start [1/16] %v1692, 128
        %1933 = vxpose.xlu0.b32.cont [2/16] %v1693, 128
        %1934 = vxpose.xlu0.b32.cont [3/16] %v1694, 128
        %1935 = vxpose.xlu0.b32.cont [4/16] %v1695, 128
        %1936 = vxpose.xlu0.b32.cont [5/16] %v1696, 128
        %1937 = vxpose.xlu0.b32.cont [6/16] %v1697, 128
        %1938 = vxpose.xlu0.b32.cont [7/16] %v1698, 128
        %1939 = vxpose.xlu0.b32.cont [8/16] %v1699, 128
        %1940 = vxpose.xlu0.b32.cont [9/16] %v1700, 128
        %1941 = vxpose.xlu0.b32.cont [10/16] %v1701, 128
        %1942 = vxpose.xlu0.b32.cont [11/16] %v1702, 128
        %1943 = vxpose.xlu0.b32.cont [12/16] %v1703, 128
        %1944 = vxpose.xlu0.b32.cont [13/16] %v1704, 128
        %1945 = vxpose.xlu0.b32.cont [14/16] %v1705, 128
        %1946 = vxpose.xlu0.b32.cont [15/16] %v1706, 128
        %1947 = vxpose.xlu0.b32.end [16/16] %v1707, 128
        %v1948 = vpop.trf.xlu0
        %v1949 = vpop.trf.xlu0
        %v1950 = vpop.trf.xlu0
        %v1951 = vpop.trf.xlu0
        %v1952 = vpop.trf.xlu0
        %v1953 = vpop.trf.xlu0
        %v1954 = vpop.trf.xlu0
        %v1955 = vpop.trf.xlu0
        %v1956 = vpop.trf.xlu0
        %v1957 = vpop.trf.xlu0
        %v1958 = vpop.trf.xlu0
        %v1959 = vpop.trf.xlu0
        %v1960 = vpop.trf.xlu0
        %v1961 = vpop.trf.xlu0
        %v1962 = vpop.trf.xlu0
        %v1963 = vpop.trf.xlu0
        %v1964 = vand.u32 2147483647, %v1724
        %v1965 = vand.u32 2147483647, %v1756
        %v1966 = vand.u32 2147483647, %v1788
        %v1967 = vand.u32 2147483647, %v1820
        %v1968 = vand.u32 2147483647, %v1852
        %v1969 = vand.u32 2147483647, %v1884
        %v1970 = vand.u32 2147483647, %v1916
        %v1971 = vand.u32 2147483647, %v1948
        %vm1972 = vcmp.lt.f32.partialorder %v1964, 1.0
        %vm1973 = vcmp.lt.f32.partialorder %v1965, 1.0
        %vm1974 = vcmp.lt.f32.partialorder %v1966, 1.0
        %vm1975 = vcmp.lt.f32.partialorder %v1967, 1.0
        %vm1976 = vcmp.lt.f32.partialorder %v1968, 1.0
        %vm1977 = vcmp.lt.f32.partialorder %v1969, 1.0
        %vm1978 = vcmp.lt.f32.partialorder %v1970, 1.0
        %vm1979 = vcmp.lt.f32.partialorder %v1971, 1.0
        %v1980 = vmul.f32 %v1724, 0.5
        %v1981 = vmul.f32 %v1756, 0.5
        %v1982 = vmul.f32 %v1788, 0.5
        %v1983 = vmul.f32 %v1820, 0.5
        %v1984 = vmul.f32 %v1852, 0.5
        %v1985 = vmul.f32 %v1884, 0.5
        %v1986 = vmul.f32 %v1916, 0.5
        %v1987 = vmul.f32 %v1948, 0.5
        %v1988 = vmul.f32 %v1980, %v1724
        %v1989 = vmul.f32 %v1981, %v1756
        %v1990 = vmul.f32 %v1982, %v1788
        %v1991 = vmul.f32 %v1983, %v1820
        %v1992 = vmul.f32 %v1984, %v1852
        %v1993 = vmul.f32 %v1985, %v1884
        %v1994 = vmul.f32 %v1986, %v1916
        %v1995 = vmul.f32 %v1987, %v1948
        %v1996 = vsub.f32 %v1964, 0.5
        %v1997 = vsub.f32 %v1965, 0.5
        %v1998 = vsub.f32 %v1966, 0.5
        %v1999 = vsub.f32 %v1967, 0.5
        %v2000 = vsub.f32 %v1968, 0.5
        %v2001 = vsub.f32 %v1969, 0.5
        %v2002 = vsub.f32 %v1970, 0.5
        %v2003 = vsub.f32 %v1971, 0.5
        %v2004 = vsel %vm1972, %v1988, %v1996
        %v2005 = vsel %vm1973, %v1989, %v1997
        %v2006 = vsel %vm1974, %v1990, %v1998
        %v2007 = vsel %vm1975, %v1991, %v1999
        %v2008 = vsel %vm1976, %v1992, %v2000
        %v2009 = vsel %vm1977, %v1993, %v2001
        %v2010 = vsel %vm1978, %v1994, %v2002
        %v2011 = vsel %vm1979, %v1995, %v2003
        %vm2012 = vcmask 1043456
        %v2013 = vsel %vm2012, %v2004, 0.0
        %v2014 = vrot.slane %v2013, 4
        %v2015 = vadd.f32 %v2013, %v2014
        %v2016 = vrot.slane %v2015, 2
        %v2017 = vadd.f32 %v2015, %v2016
        %v2018 = vrot.slane %v2017, 1
        %v2019 = vadd.f32 %v2017, %v2018
        %v2020 = vsel %vm2012, %v2005, 0.0
        %v2021 = vrot.slane %v2020, 4
        %v2022 = vadd.f32 %v2020, %v2021
        %v2023 = vrot.slane %v2022, 2
        %v2024 = vadd.f32 %v2022, %v2023
        %v2025 = vrot.slane %v2024, 1
        %v2026 = vadd.f32 %v2024, %v2025
        %v2027 = vsel %vm2012, %v2006, 0.0
        %v2028 = vrot.slane %v2027, 4
        %v2029 = vadd.f32 %v2027, %v2028
        %v2030 = vrot.slane %v2029, 2
        %v2031 = vadd.f32 %v2029, %v2030
        %v2032 = vrot.slane %v2031, 1
        %v2033 = vadd.f32 %v2031, %v2032
        %v2034 = vsel %vm2012, %v2007, 0.0
        %v2035 = vrot.slane %v2034, 4
        %v2036 = vadd.f32 %v2034, %v2035
        %v2037 = vrot.slane %v2036, 2
        %v2038 = vadd.f32 %v2036, %v2037
        %v2039 = vrot.slane %v2038, 1
        %v2040 = vadd.f32 %v2038, %v2039
        %v2041 = vsel %vm2012, %v2008, 0.0
        %v2042 = vrot.slane %v2041, 4
        %v2043 = vadd.f32 %v2041, %v2042
        %v2044 = vrot.slane %v2043, 2
        %v2045 = vadd.f32 %v2043, %v2044
        %v2046 = vrot.slane %v2045, 1
        %v2047 = vadd.f32 %v2045, %v2046
        %v2048 = vsel %vm2012, %v2009, 0.0
        %v2049 = vrot.slane %v2048, 4
        %v2050 = vadd.f32 %v2048, %v2049
        %v2051 = vrot.slane %v2050, 2
        %v2052 = vadd.f32 %v2050, %v2051
        %v2053 = vrot.slane %v2052, 1
        %v2054 = vadd.f32 %v2052, %v2053
        %v2055 = vsel %vm2012, %v2010, 0.0
        %v2056 = vrot.slane %v2055, 4
        %v2057 = vadd.f32 %v2055, %v2056
        %v2058 = vrot.slane %v2057, 2
        %v2059 = vadd.f32 %v2057, %v2058
        %v2060 = vrot.slane %v2059, 1
        %v2061 = vadd.f32 %v2059, %v2060
        %v2062 = vsel %vm2012, %v2011, 0.0
        %v2063 = vrot.slane %v2062, 4
        %v2064 = vadd.f32 %v2062, %v2063
        %v2065 = vrot.slane %v2064, 2
        %v2066 = vadd.f32 %v2064, %v2065
        %v2067 = vrot.slane %v2066, 1
        %v2068 = vadd.f32 %v2066, %v2067
        %v2069 = vld [vmem:[#allocation4] sm:$0x1]
        %v2078 = vcombine.low %v2019, %v2026
        %v2079 = vcombine.low %v2033, %v2040
        %v2080 = vcombine.low %v2047, %v2054
        %v2081 = vcombine.low %v2061, %v2068
        %v2083 = vunpack.c.l.s4 1966171168
        %v2084 = vunpack.c.0.s8 %v2083
        %v2085 = vlaneseq
        %v2086 = vshrl.u32 %v2085, 7
        %v2087 = vsub.s32 %v2084, %v2086
        %v2088 = vrot.slane %v2078, %v2087
        %v2090 = vunpack.c.l.s4 1966171168
        %v2091 = vunpack.c.0.s8 %v2090
        %v2092 = vlaneseq
        %v2093 = vshrl.u32 %v2092, 7
        %v2094 = vsub.s32 %v2091, %v2093
        %v2095 = vrot.slane %v2079, %v2094
        %v2097 = vunpack.c.l.s4 1966171168
        %v2098 = vunpack.c.0.s8 %v2097
        %v2099 = vlaneseq
        %v2100 = vshrl.u32 %v2099, 7
        %v2101 = vsub.s32 %v2098, %v2100
        %v2102 = vrot.slane %v2080, %v2101
        %v2104 = vunpack.c.l.s4 1966171168
        %v2105 = vunpack.c.0.s8 %v2104
        %v2106 = vlaneseq
        %v2107 = vshrl.u32 %v2106, 7
        %v2108 = vsub.s32 %v2105, %v2107
        %v2109 = vrot.slane %v2081, %v2108
        %v2110 = vcombine.low %v2088, %v2095
        %v2111 = vcombine.low %v2102, %v2109
        %v2113 = vunpack.c.l.s4 1966171168
        %v2114 = vunpack.c.0.s8 %v2113
        %v2115 = vlaneseq
        %v2116 = vshrl.u32 %v2115, 7
        %v2117 = vsub.s32 %v2114, %v2116
        %v2118 = vrot.slane %v2110, %v2117
        %v2120 = vunpack.c.l.s4 1966171168
        %v2121 = vunpack.c.0.s8 %v2120
        %v2122 = vlaneseq
        %v2123 = vshrl.u32 %v2122, 7
        %v2124 = vsub.s32 %v2121, %v2123
        %v2125 = vrot.slane %v2111, %v2124
        %v2126 = vcombine.low %v2118, %v2125
        %v2128 = vmul.f32 %v339, %v2126
        %v2130 = vlaneseq
        %v2131 = vshrl.u32 %v2130, 7
        %v2132 = vsub.s32 0, %v2131
        %v2133 = vrot.slane %v2128, %v2132
        %v2134 = vlaneseq
        %v2135 = vshrl.u32 %v2134, 7
        %v2136 = vsub.s32 1, %v2135
        %v2137 = vrot.slane %v2128, %v2136
        %v2138 = vlaneseq
        %v2139 = vshrl.u32 %v2138, 7
        %v2140 = vsub.s32 2, %v2139
        %v2141 = vrot.slane %v2128, %v2140
        %v2142 = vlaneseq
        %v2143 = vshrl.u32 %v2142, 7
        %v2144 = vsub.s32 3, %v2143
        %v2145 = vrot.slane %v2128, %v2144
        %v2146 = vlaneseq
        %v2147 = vshrl.u32 %v2146, 7
        %v2148 = vsub.s32 4, %v2147
        %v2149 = vrot.slane %v2128, %v2148
        %v2150 = vlaneseq
        %v2151 = vshrl.u32 %v2150, 7
        %v2152 = vsub.s32 5, %v2151
        %v2153 = vrot.slane %v2128, %v2152
        %v2154 = vlaneseq
        %v2155 = vshrl.u32 %v2154, 7
        %v2156 = vsub.s32 6, %v2155
        %v2157 = vrot.slane %v2128, %v2156
        %v2158 = vlaneseq
        %v2159 = vshrl.u32 %v2158, 7
        %v2160 = vsub.s32 7, %v2159
        %v2161 = vrot.slane %v2128, %v2160
        %v2170 = vsel %vm1163, %v2133, 0.0
        %v2171 = vsel %vm1163, %v2137, 0.0
        %v2172 = vadd.f32 %v2170, %v2171
        %v2173 = vsel %vm1163, %v2141, 0.0
        %v2174 = vadd.f32 %v2172, %v2173
        %v2175 = vsel %vm1163, %v2145, 0.0
        %v2176 = vadd.f32 %v2174, %v2175
        %v2177 = vsel %vm1163, %v2149, 0.0
        %v2178 = vadd.f32 %v2176, %v2177
        %v2179 = vsel %vm1163, %v2153, 0.0
        %v2180 = vadd.f32 %v2178, %v2179
        %v2181 = vsel %vm1163, %v2157, 0.0
        %v2182 = vadd.f32 %v2180, %v2181
        %v2183 = vsel %vm1163, %v2161, 0.0
        %v2184 = vadd.f32 %v2182, %v2183
        %2185 = vadd.xlane.f32.xlu0 %v2184
        %v2186 = vpop.xlane.xlu0 %2185
        %v2187 = vrot.slane %v2186, 4
        %v2188 = vadd.f32 %v2186, %v2187
        %v2189 = vrot.slane %v2188, 2
        %v2190 = vadd.f32 %v2188, %v2189
        %v2191 = vrot.slane %v2190, 1
        %v2192 = vadd.f32 %v2190, %v2191
        %s2193 = vtos %v2192
        %v2194 = vstv %s2193
        %v2195 = vadd.f32 %v2069, %v2194
        %2196 = vst.msk [vmem:[#allocation4] sm:$0x1] %vm1190, %v2195
        // Predicated region
        $region41: #{tpu_custom_call.1} parent=35 // pred_check
          %p2197 = pneg %p328
        $region42: #{tpu_custom_call.1} parent=35 // pred_check_branch
          %2199 = sbr.rel (%p2197) target = $region44
        $region43: #{tpu_custom_call.1} parent=35 // pred_region
          %v2200 = vld [vmem:[#allocation3] sm:$0x1]
          %v2201 = vmul.f32 %v2200, 3.0
          %v2202 = vmin.f32 %v2201, 1024.0
          loop: start=0, step=1, limit=32
          $region45: #{tpu_custom_call.1} parent=43 // loop_pre_header
            _
          $region46: #{tpu_custom_call.1} parent=43 // loop_header
            %s2204 = sphi 0, %s2208
            %p2205 = scmp.ge.s32.totalorder %s2204, 32
            %v2209 = vphi 0, %v2294
            %v2210 = vphi 2139095040, %v2296
          $region47: #{tpu_custom_call.1} parent=43 // loop_header_branch
            %2207 = sbr.rel (%p2205) target = $region51
          $region48: #{tpu_custom_call.1} parent=43 // loop_body
            %v2211 = vsub.s32 %v2210, %v2209
            %v2212 = vadd.s32 %v2211, 1
            %v2213 = vshra.s32 %v2212, 1
            %v2214 = vadd.s32 %v2209, %v2213
            %v2215 = vld [vmem:[#allocation2] sm:$0xff]
            %2216 = vset.pattern.permute.xlu0 0
            %2217 = vperm.xlu0 %2216, %v2214
            %v2218 = vpop.permute.xlu0 %2217
            %v2219 = vlaneseq
            %v2220 = vshrl.u32 %v2219, 7
            %v2221 = vsub.s32 0, %v2220
            %v2222 = vrot.slane %v2218, %v2221
            %vm2224 = vcmp.ge.f32.partialorder %v2215, %v2222
            %v2225 = vsel %vm2224, 1, 0
            %v2226 = vcvt.s32.f32 %v2225
            %v2228 = vlaneseq
            %v2229 = vshrl.u32 %v2228, 7
            %v2230 = vsub.s32 0, %v2229
            %v2231 = vrot.slane %v2226, %v2230
            %v2232 = vlaneseq
            %v2233 = vshrl.u32 %v2232, 7
            %v2234 = vsub.s32 1, %v2233
            %v2235 = vrot.slane %v2226, %v2234
            %v2236 = vlaneseq
            %v2237 = vshrl.u32 %v2236, 7
            %v2238 = vsub.s32 2, %v2237
            %v2239 = vrot.slane %v2226, %v2238
            %v2240 = vlaneseq
            %v2241 = vshrl.u32 %v2240, 7
            %v2242 = vsub.s32 3, %v2241
            %v2243 = vrot.slane %v2226, %v2242
            %v2244 = vlaneseq
            %v2245 = vshrl.u32 %v2244, 7
            %v2246 = vsub.s32 4, %v2245
            %v2247 = vrot.slane %v2226, %v2246
            %v2248 = vlaneseq
            %v2249 = vshrl.u32 %v2248, 7
            %v2250 = vsub.s32 5, %v2249
            %v2251 = vrot.slane %v2226, %v2250
            %v2252 = vlaneseq
            %v2253 = vshrl.u32 %v2252, 7
            %v2254 = vsub.s32 6, %v2253
            %v2255 = vrot.slane %v2226, %v2254
            %v2256 = vlaneseq
            %v2257 = vshrl.u32 %v2256, 7
            %v2258 = vsub.s32 7, %v2257
            %v2259 = vrot.slane %v2226, %v2258
            %v2268 = vsel %vm1163, %v2231, 0.0
            %v2269 = vsel %vm1163, %v2235, 0.0
            %v2270 = vadd.f32 %v2268, %v2269
            %v2271 = vsel %vm1163, %v2239, 0.0
            %v2272 = vadd.f32 %v2270, %v2271
            %v2273 = vsel %vm1163, %v2243, 0.0
            %v2274 = vadd.f32 %v2272, %v2273
            %v2275 = vsel %vm1163, %v2247, 0.0
            %v2276 = vadd.f32 %v2274, %v2275
            %v2277 = vsel %vm1163, %v2251, 0.0
            %v2278 = vadd.f32 %v2276, %v2277
            %v2279 = vsel %vm1163, %v2255, 0.0
            %v2280 = vadd.f32 %v2278, %v2279
            %v2281 = vsel %vm1163, %v2259, 0.0
            %v2282 = vadd.f32 %v2280, %v2281
            %2283 = vadd.xlane.f32.xlu0 %v2282
            %v2284 = vpop.xlane.xlu0 %2283
            %v2285 = vrot.slane %v2284, 4
            %v2286 = vadd.f32 %v2284, %v2285
            %v2287 = vrot.slane %v2286, 2
            %v2288 = vadd.f32 %v2286, %v2287
            %v2289 = vrot.slane %v2288, 1
            %v2290 = vadd.f32 %v2288, %v2289
            %s2291 = vtos %v2290
            %v2292 = vstv %s2291
            %vm2293 = vcmp.ge.f32.partialorder %v2292, %v2202
            %v2294 = vsel %vm2293, %v2214, %v2209
            %v2295 = vsub.s32 %v2214, 1
            %v2296 = vsel %vm2293, %v2210, %v2295
          $region49: #{tpu_custom_call.1} parent=43 // loop_footer
            %s2208 = sadd.s32 1, %s2204
          $region50: #{tpu_custom_call.1} parent=43 // loop_footer_branch
            %2203 = sbr.rel target = $region46
          $region51: #{tpu_custom_call.1} parent=43 // loop_exit
            _
          %v2298 = vld [vmem:[#allocation2] sm:$0xff]
          %2299 = vset.pattern.permute.xlu0 0
          %2300 = vperm.xlu0 %2299, %v2209
          %v2301 = vpop.permute.xlu0 %2300
          %v2302 = vlaneseq
          %v2303 = vshrl.u32 %v2302, 7
          %v2304 = vsub.s32 0, %v2303
          %v2305 = vrot.slane %v2301, %v2304
          %vm2307 = vcmp.gt.f32.partialorder %v2298, %v2305
          %v2308 = vsel %vm2307, %v2298, 0.0
          %v2310 = vlaneseq
          %v2311 = vshrl.u32 %v2310, 7
          %v2312 = vsub.s32 0, %v2311
          %v2313 = vrot.slane %v2308, %v2312
          %v2314 = vlaneseq
          %v2315 = vshrl.u32 %v2314, 7
          %v2316 = vsub.s32 1, %v2315
          %v2317 = vrot.slane %v2308, %v2316
          %v2318 = vlaneseq
          %v2319 = vshrl.u32 %v2318, 7
          %v2320 = vsub.s32 2, %v2319
          %v2321 = vrot.slane %v2308, %v2320
          %v2322 = vlaneseq
          %v2323 = vshrl.u32 %v2322, 7
          %v2324 = vsub.s32 3, %v2323
          %v2325 = vrot.slane %v2308, %v2324
          %v2326 = vlaneseq
          %v2327 = vshrl.u32 %v2326, 7
          %v2328 = vsub.s32 4, %v2327
          %v2329 = vrot.slane %v2308, %v2328
          %v2330 = vlaneseq
          %v2331 = vshrl.u32 %v2330, 7
          %v2332 = vsub.s32 5, %v2331
          %v2333 = vrot.slane %v2308, %v2332
          %v2334 = vlaneseq
          %v2335 = vshrl.u32 %v2334, 7
          %v2336 = vsub.s32 6, %v2335
          %v2337 = vrot.slane %v2308, %v2336
          %v2338 = vlaneseq
          %v2339 = vshrl.u32 %v2338, 7
          %v2340 = vsub.s32 7, %v2339
          %v2341 = vrot.slane %v2308, %v2340
          %v2350 = vsel %vm1163, %v2313, 0.0
          %v2351 = vsel %vm1163, %v2317, 0.0
          %v2352 = vadd.f32 %v2350, %v2351
          %v2353 = vsel %vm1163, %v2321, 0.0
          %v2354 = vadd.f32 %v2352, %v2353
          %v2355 = vsel %vm1163, %v2325, 0.0
          %v2356 = vadd.f32 %v2354, %v2355
          %v2357 = vsel %vm1163, %v2329, 0.0
          %v2358 = vadd.f32 %v2356, %v2357
          %v2359 = vsel %vm1163, %v2333, 0.0
          %v2360 = vadd.f32 %v2358, %v2359
          %v2361 = vsel %vm1163, %v2337, 0.0
          %v2362 = vadd.f32 %v2360, %v2361
          %v2363 = vsel %vm1163, %v2341, 0.0
          %v2364 = vadd.f32 %v2362, %v2363
          %2365 = vadd.xlane.f32.xlu0 %v2364
          %v2366 = vpop.xlane.xlu0 %2365
          %v2367 = vrot.slane %v2366, 4
          %v2368 = vadd.f32 %v2366, %v2367
          %v2369 = vrot.slane %v2368, 2
          %v2370 = vadd.f32 %v2368, %v2369
          %v2371 = vrot.slane %v2370, 1
          %v2372 = vadd.f32 %v2370, %v2371
          %s2373 = vtos %v2372
          %v2374 = vstv %s2373
          %v2375 = vsel %vm2307, 1, 0
          %v2376 = vcvt.s32.f32 %v2375
          %v2378 = vlaneseq
          %v2379 = vshrl.u32 %v2378, 7
          %v2380 = vsub.s32 0, %v2379
          %v2381 = vrot.slane %v2376, %v2380
          %v2382 = vlaneseq
          %v2383 = vshrl.u32 %v2382, 7
          %v2384 = vsub.s32 1, %v2383
          %v2385 = vrot.slane %v2376, %v2384
          %v2386 = vlaneseq
          %v2387 = vshrl.u32 %v2386, 7
          %v2388 = vsub.s32 2, %v2387
          %v2389 = vrot.slane %v2376, %v2388
          %v2390 = vlaneseq
          %v2391 = vshrl.u32 %v2390, 7
          %v2392 = vsub.s32 3, %v2391
          %v2393 = vrot.slane %v2376, %v2392
          %v2394 = vlaneseq
          %v2395 = vshrl.u32 %v2394, 7
          %v2396 = vsub.s32 4, %v2395
          %v2397 = vrot.slane %v2376, %v2396
          %v2398 = vlaneseq
          %v2399 = vshrl.u32 %v2398, 7
          %v2400 = vsub.s32 5, %v2399
          %v2401 = vrot.slane %v2376, %v2400
          %v2402 = vlaneseq
          %v2403 = vshrl.u32 %v2402, 7
          %v2404 = vsub.s32 6, %v2403
          %v2405 = vrot.slane %v2376, %v2404
          %v2406 = vlaneseq
          %v2407 = vshrl.u32 %v2406, 7
          %v2408 = vsub.s32 7, %v2407
          %v2409 = vrot.slane %v2376, %v2408
          %v2418 = vsel %vm1163, %v2381, 0.0
          %v2419 = vsel %vm1163, %v2385, 0.0
          %v2420 = vadd.f32 %v2418, %v2419
          %v2421 = vsel %vm1163, %v2389, 0.0
          %v2422 = vadd.f32 %v2420, %v2421
          %v2423 = vsel %vm1163, %v2393, 0.0
          %v2424 = vadd.f32 %v2422, %v2423
          %v2425 = vsel %vm1163, %v2397, 0.0
          %v2426 = vadd.f32 %v2424, %v2425
          %v2427 = vsel %vm1163, %v2401, 0.0
          %v2428 = vadd.f32 %v2426, %v2427
          %v2429 = vsel %vm1163, %v2405, 0.0
          %v2430 = vadd.f32 %v2428, %v2429
          %v2431 = vsel %vm1163, %v2409, 0.0
          %v2432 = vadd.f32 %v2430, %v2431
          %2433 = vadd.xlane.f32.xlu0 %v2432
          %v2434 = vpop.xlane.xlu0 %2433
          %v2435 = vrot.slane %v2434, 4
          %v2436 = vadd.f32 %v2434, %v2435
          %v2437 = vrot.slane %v2436, 2
          %v2438 = vadd.f32 %v2436, %v2437
          %v2439 = vrot.slane %v2438, 1
          %v2440 = vadd.f32 %v2438, %v2439
          %s2441 = vtos %v2440
          %v2442 = vstv %s2441
          %v2443 = vsub.f32 %v2202, %v2442
          %vm2444 = vcmp.gt.f32.partialorder %v2443, 0.0
          %v2445 = vmul.f32 %v2443, %v2209
          %v2446 = vsel %vm2444, %v2445, 0.0
          %v2447 = vadd.f32 %v2374, %v2446
          %v2448 = vld [vmem:[#allocation5] sm:$0x1]
          %v2449 = vadd.f32 %v2448, %v2447
          %v2450 = vlaneseq
          %v2451 = vand.u32 %v2450, 127
          %vm2452 = vcmp.eq.s32.totalorder %v2451, 0
          %2454 = vset.pattern.permute.xlu0 0
          %2455 = vperm.xlu0 %2454, %v2200
          %v2456 = vpop.permute.xlu0 %2455
          %v2458 = vlaneseq
          %v2459 = vshrl.u32 %v2458, 7
          %v2460 = vsub.s32 0, %v2459
          %v2461 = vrot.slane %v2456, %v2460
          %v2462 = vsel %vm2452, %v2461, 0.0
          %vm2463 = vcmp.eq.s32.totalorder %v2451, 1
          %v2464 = vld [vmem:[#allocation4] sm:$0x1]
          %2466 = vset.pattern.permute.xlu0 0
          %2467 = vperm.xlu0 %2466, %v2464
          %v2468 = vpop.permute.xlu0 %2467
          %v2470 = vlaneseq
          %v2471 = vshrl.u32 %v2470, 7
          %v2472 = vsub.s32 0, %v2471
          %v2473 = vrot.slane %v2468, %v2472
          %v2474 = vsel %vm2463, %v2473, 0.0
          %v2475 = vadd.f32 %v2462, %v2474
          %vm2476 = vcmp.eq.s32.totalorder %v2451, 2
          %2478 = vset.pattern.permute.xlu0 0
          %2479 = vperm.xlu0 %2478, %v2449
          %v2480 = vpop.permute.xlu0 %2479
          %v2482 = vlaneseq
          %v2483 = vshrl.u32 %v2482, 7
          %v2484 = vsub.s32 0, %v2483
          %v2485 = vrot.slane %v2480, %v2484
          %v2486 = vsel %vm2476, %v2485, 0.0
          %v2487 = vadd.f32 %v2475, %v2486
          %2488 = vst [vmem:[%s288] sm:$0x1] %v2487
        $region44: #{tpu_custom_call.1} parent=35 // pred_fallthru
          _
        %s2489 = sand.u32 %s150, 1
        %s2490 = scalar_lea.sflag [#allocation7], %s2489
        %s2491 = sand.u32 %s150, 1
        %s2492 = scalar_lea.vmem [#allocation6], %s2491
        // Predicated region
        $region52: #{tpu_custom_call.1} parent=35 // pred_check
          %p2493 = pneg %p160
        $region53: #{tpu_custom_call.1} parent=35 // pred_check_branch
          %2495 = sbr.rel (%p2493) target = $region55
        $region54: #{tpu_custom_call.1} parent=35 // pred_region
          %s2497 = ssub.s32 16, 16
          %2498 = vsyncadd %s2490, %s2497
          %s2499 = smul.addr %s22, 16
          %s2500 = scalar_lea.hbm %s4, %s2499
          %s2502 = sshll.u32 %s2492, 4
          %s2503 = int_to_ptr.vmem [resolvable:$true] %s2502
          %2505 = dma.vmem_to_hbm [thread:$0]  %s2503, 16, %s2500, %s2490
        $region55: #{tpu_custom_call.1} parent=35 // pred_fallthru
          _
      $region36: #{tpu_custom_call.1} parent=5 // pred_fallthru
        _
      %p2506 = scmp.le.s32.totalorder 2, %s13
      // Predicated region
      $region56: #{tpu_custom_call.1} parent=5 // pred_check
        %p2507 = pneg %p2506
      $region57: #{tpu_custom_call.1} parent=5 // pred_check_branch
        %2509 = sbr.rel (%p2507) target = $region59
      $region58: #{tpu_custom_call.1} parent=5 // pred_region
        %s2510 = ssub.s32 %s13, 2
        // Predicated region
        $region60: #{tpu_custom_call.1} parent=58 // pred_check
          %p2511 = pneg %p166
        $region61: #{tpu_custom_call.1} parent=58 // pred_check_branch
          %2513 = sbr.rel (%p2511) target = $region63
        $region62: #{tpu_custom_call.1} parent=58 // pred_region
          %s2514 = sand.u32 %s151, 1
          %s2515 = scalar_lea.sflag [#allocation7], %s2514
          %s2516 = sand.u32 %s151, 1
          %s2517 = scalar_lea.vmem [#allocation6], %s2516
          %2518 = dma.done %s2515, 16
        $region63: #{tpu_custom_call.1} parent=58 // pred_fallthru
          _
      $region59: #{tpu_custom_call.1} parent=5 // pred_fallthru
        _
    $region6: #{tpu_custom_call.1} parent=1 // loop_footer
      %s17 = sadd.s32 1, %s13
    $region7: #{tpu_custom_call.1} parent=1 // loop_footer_branch
      %12 = sbr.rel target = $region3
    $region8: #{tpu_custom_call.1} parent=1 // loop_exit
      _
    %2519 = vsyncpa [#allocation7], 1
    %s2520 = scalar_lea.sflag [#allocation7], 1
    %2521 = vsyncpa %s2520, 1

</llo_original>
